<compile_context>
chip_gen: v5e
topology: v5e:2x2
jax: 0.10.0
libtpu: 0.0.40
codegen_flags: <defaults>
</compile_context>

<pallas_src>
import numpy as np

import jax
import jax.numpy as jnp
from jax import lax
from jax.experimental import pallas as pl
from jax.experimental.pallas import tpu as pltpu  # noqa: F401  (TPU backend assumed)

# ----------------------------- problem sizes --------------------------------
B = 2
CIN = 4
H = W = 8
N = H * W                 # spatial tokens per image
C = 48                    # num_features (divisible by num_heads=6)
NUM_HEADS = 6
HEAD_DIM = C // NUM_HEADS
K = 10                    # num_classes (query count)
SCALE = HEAD_DIM ** (-0.5)
EPS = 1e-6

# Block-diagonal head mask: row h*K + k is nonzero only on head h's channels.
_BLOCKMASK_NP = np.kron(np.eye(NUM_HEADS, dtype=np.float32),
                        np.ones((K, HEAD_DIM), dtype=np.float32))   # (H*K, C)


# ----------------------------- Pallas kernel --------------------------------
def vitnet_kernel(x_ref, wc_ref, bc_ref, qeb_ref, wq_ref, bq_ref, wk_ref, bk_ref,
                  mask_ref, nw_ref, nb_ref, w1_ref, b1_ref, w2_ref, b2_ref,
                  logits_ref, featn_ref):
    """Fused backbone.extract + avg-pool + multi-head attention + LayerNorm + head."""
    # ---- backbone.extract: 1x1 conv (CIN -> C) as CIN broadcast-FMAs on the VPU ----
    x = x_ref[...]                                   # (B*N, CIN)
    wc = wc_ref[...]                                 # (CIN, C)
    f = bc_ref[...] + x[:, 0:1] * wc[0:1, :]
    for c in range(1, CIN):
        f = f + x[:, c:c + 1] * wc[c:c + 1, :]       # (B*N, C)

    # ---- linear_k over all B*N tokens in one 128-row MXU matmul ----
    k_all = jnp.dot(f, wk_ref[...], preferred_element_type=jnp.float32) + bk_ref[...]

    # ---- block-expanded query projection (computed once, shared across batch) ----
    # qeb is query_embed tiled to (H*K, C); masking keeps only head h's channels
    # in row h*K + k, so ONE matmul against k yields all per-head scores.
    mask = mask_ref[...]                             # (H*K, C)
    q_blk = (jnp.dot(qeb_ref[...], wq_ref[...],
                     preferred_element_type=jnp.float32) + bq_ref[...]) * mask

    nw = nw_ref[...]                                 # (1, C) LayerNorm gamma
    nb = nb_ref[...]                                 # (1, C) LayerNorm beta
    wd = w1_ref[...] - w2_ref[...]                   # (K, C)  classifier - classifier2
    bd = b1_ref[...] - b2_ref[...]                   # (K, 1)

    # eye(K) used to rotate the (K,1) logits column into a lane-dense (1,K) row.
    rid = lax.broadcasted_iota(jnp.int32, (K, K), 0)
    cid = lax.broadcasted_iota(jnp.int32, (K, K), 1)
    eye = (rid == cid).astype(jnp.float32)

    for b in range(B):                               # B = 2, unrolled
        kb = k_all[b * N:(b + 1) * N, :]             # (N, C)
        vb = f[b * N:(b + 1) * N, :]                 # (N, C)   v = raw tokens
        # F.adaptive_avg_pool2d(feat, 1) == mean over spatial positions
        pooled = jnp.mean(vb, axis=0, keepdims=True)                     # (1, C)

        # all-head attention scores in a single matmul (block-diagonal q)
        s = lax.dot_general(q_blk, kb, (((1,), (1,)), ((), ())),
                            preferred_element_type=jnp.float32) * SCALE  # (H*K, N)
        s = s - jnp.max(s, axis=-1, keepdims=True)
        p = jnp.exp(s)
        p = p * pl.reciprocal(jnp.sum(p, axis=-1, keepdims=True), approx=True)

        # all-head outputs in a single matmul, then gather the block diagonal
        ob = jnp.dot(p, vb, preferred_element_type=jnp.float32) * mask   # (H*K, C)
        attn = ob[0:K, :]
        for h in range(1, NUM_HEADS):
            attn = attn + ob[h * K:(h + 1) * K, :]                       # (K, C)

        # ls1 / drop_path1 / dropouts are Identity at default config
        feat = pooled + attn                                             # (K, C)

        # LayerNorm over C, eps=1e-6
        mu = jnp.mean(feat, axis=-1, keepdims=True)
        var = jnp.mean((feat - mu) ** 2, axis=-1, keepdims=True)
        featn = (feat - mu) * lax.rsqrt(var + EPS) * nw + nb
        featn_ref[b] = featn

        # head_forward: sum(x*W1,-1)+b1 - (sum(x*W2,-1)+b2), emitted lane-dense
        col = jnp.sum(featn * wd, axis=-1, keepdims=True) + bd           # (K, 1)
        logits_ref[b] = jnp.sum(col * eye, axis=0, keepdims=True)        # (1, K)


# ----------------------------- wrapper ---------------------------------------
@jax.jit
def vitnet_forward(x_nchw, params):
    # glue: NCHW -> token-major, batch flattened so matmuls see 128 MXU rows
    x_tok = x_nchw.reshape(B, CIN, N).transpose(0, 2, 1).reshape(B * N, CIN)
    qe_blk = jnp.tile(params["query_embed"], (NUM_HEADS, 1))      # (H*K, C)
    blockmask = jnp.asarray(_BLOCKMASK_NP)                        # (H*K, C)

    # Single fused, grid-less pallas_call: whole working set (<100 KiB) lives in
    # VMEM on all generations (v5e/v6e/v7x), so no tiling / pipelining is needed.
    logits, featn = pl.pallas_call(
        vitnet_kernel,
        out_shape=(jax.ShapeDtypeStruct((B, 1, K), jnp.float32),
                   jax.ShapeDtypeStruct((B, K, C), jnp.float32)),
    )(x_tok, params["wc"], params["bc"], qe_blk,
      params["wq"], params["bq"], params["wk"], params["bk"],
      blockmask,
      params["norm_w"], params["norm_b"],
      params["w_bb"], params["b_bb"], params["w_c2"], params["b_c2"])

    return {"logits": logits[:, 0, :], "feat": featn}


# ----------------------------- pure-JAX reference -----------------------------
def vitnet_reference(x_nchw, p):
    xt = x_nchw.reshape(B, CIN, N).transpose(0, 2, 1)
    tok = xt @ p["wc"] + p["bc"]                                  # (B, N, C)
    pooled = tok.mean(axis=1, keepdims=True)                      # (B, 1, C)
    q = p["query_embed"] @ p["wq"] + p["bq"]                      # (K, C)
    k = tok @ p["wk"] + p["bk"]                                   # (B, N, C)
    qh = q.reshape(K, NUM_HEADS, HEAD_DIM).transpose(1, 0, 2)     # (h, K, d)
    kh = k.reshape(B, N, NUM_HEADS, HEAD_DIM).transpose(0, 2, 1, 3)
    vh = tok.reshape(B, N, NUM_HEADS, HEAD_DIM).transpose(0, 2, 1, 3)
    attn = jnp.einsum("hkd,bhnd->bhkn", qh, kh) * SCALE
    attn = jax.nn.softmax(attn, axis=-1)
    out = jnp.einsum("bhkn,bhnd->bhkd", attn, vh).transpose(0, 2, 1, 3).reshape(B, K, C)
    feat = pooled + out
    mu = feat.mean(-1, keepdims=True)
    var = ((feat - mu) ** 2).mean(-1, keepdims=True)
    featn = (feat - mu) / jnp.sqrt(var + EPS) * p["norm_w"] + p["norm_b"]
    l1 = (featn * p["w_bb"]).sum(-1) + p["b_bb"][:, 0]
    l2 = (featn * p["w_c2"]).sum(-1) + p["b_c2"][:, 0]
    return {"logits": l1 - l2, "feat": featn}


# ----------------------------- parameter init ---------------------------------
def init_params(key):
    ks = jax.random.split(key, 10)

    def xavier(k, fan_out, fan_in, shape):
        std = (2.0 / (fan_in + fan_out)) ** 0.5
        return std * jax.random.normal(k, shape, jnp.float32)

    return {
        # synthetic backbone: 1x1 conv (Cin -> C) stored as (Cin, C), plus bias
        "wc": 0.2 * jax.random.normal(ks[0], (CIN, C), jnp.float32),
        "bc": 0.05 * jax.random.normal(ks[1], (1, C), jnp.float32),
        # Attention linear_q / linear_k, weights stored transposed (in, out)
        "wq": xavier(ks[2], C, C, (C, C)),
        "bq": 0.01 * jax.random.normal(ks[3], (1, C), jnp.float32),
        "wk": xavier(ks[4], C, C, (C, C)),
        "bk": 0.01 * jax.random.normal(ks[5], (1, C), jnp.float32),
        # query_embed ~ N(0,1)  (nn.init.normal_)
        "query_embed": jax.random.normal(ks[6], (K, C), jnp.float32),
        # LayerNorm
        "norm_w": jnp.ones((1, C), jnp.float32),
        "norm_b": jnp.zeros((1, C), jnp.float32),
        # backbone.classifier (synthetic) and classifier2 (xavier, zero bias)
        "w_bb": xavier(ks[7], K, C, (K, C)),
        "b_bb": 0.05 * jax.random.normal(ks[8], (K, 1), jnp.float32),
        "w_c2": xavier(ks[9], K, C, (K, C)),
        "b_c2": jnp.zeros((K, 1), jnp.float32),
        # TODO(synk): st_classifier1/2 and rot_classifier are unused on the
        # default (st_pred=False) forward path and are omitted here.
    }


if __name__ == "__main__":
    key = jax.random.PRNGKey(0)
    kx, kp = jax.random.split(key)
    x = jax.random.normal(kx, (B, CIN, H, W), jnp.float32)
    params = init_params(kp)

    out = vitnet_forward(x, params)
    jax.block_until_ready(out)

    ref = vitnet_reference(x, params)
    assert out["logits"].shape == (B, K)
    assert out["feat"].shape == (B, K, C)
    np.testing.assert_allclose(np.asarray(out["logits"]), np.asarray(ref["logits"]),
                               rtol=2e-2, atol=2e-2)
    np.testing.assert_allclose(np.asarray(out["feat"]), np.asarray(ref["feat"]),
                               rtol=2e-2, atol=2e-2)
    print("KERNEL_OK")
</pallas_src>

<mosaic_0001>
module attributes {stable_mosaic.version = 11 : i64} {
  func.func @vitnet_kernel(%arg0: memref<128x4xf32, #tpu.memory_space<vmem>>, %arg1: memref<4x48xf32, #tpu.memory_space<vmem>>, %arg2: memref<1x48xf32, #tpu.memory_space<vmem>>, %arg3: memref<60x48xf32, #tpu.memory_space<vmem>>, %arg4: memref<48x48xf32, #tpu.memory_space<vmem>>, %arg5: memref<1x48xf32, #tpu.memory_space<vmem>>, %arg6: memref<48x48xf32, #tpu.memory_space<vmem>>, %arg7: memref<1x48xf32, #tpu.memory_space<vmem>>, %arg8: memref<60x48xf32, #tpu.memory_space<vmem>>, %arg9: memref<1x48xf32, #tpu.memory_space<vmem>>, %arg10: memref<1x48xf32, #tpu.memory_space<vmem>>, %arg11: memref<10x48xf32, #tpu.memory_space<vmem>>, %arg12: memref<10x1xf32, #tpu.memory_space<vmem>>, %arg13: memref<10x48xf32, #tpu.memory_space<vmem>>, %arg14: memref<10x1xf32, #tpu.memory_space<vmem>>, %arg15: memref<2x1x10xf32, #tpu.memory_space<vmem>>, %arg16: memref<2x10x48xf32, #tpu.memory_space<vmem>>) attributes {dimension_semantics = [], scalar_prefetch = 0 : i64, scratch_operands = 0 : i64, tpu.core_type = #tpu.core_type<tc>} {
    %c0 = arith.constant 0 : index
    %c0_0 = arith.constant 0 : index
    %0 = vector.load %arg0[%c0, %c0_0] : memref<128x4xf32, #tpu.memory_space<vmem>>, vector<128x4xf32>
    %c0_1 = arith.constant 0 : index
    %c0_2 = arith.constant 0 : index
    %1 = vector.load %arg1[%c0_1, %c0_2] : memref<4x48xf32, #tpu.memory_space<vmem>>, vector<4x48xf32>
    %c0_3 = arith.constant 0 : index
    %c0_4 = arith.constant 0 : index
    %2 = vector.load %arg2[%c0_3, %c0_4] : memref<1x48xf32, #tpu.memory_space<vmem>>, vector<1x48xf32>
    %3 = vector.extract_strided_slice %0 {offsets = [0, 0], sizes = [128, 1], strides = [1, 1]} : vector<128x4xf32> to vector<128x1xf32>
    %4 = vector.extract_strided_slice %1 {offsets = [0, 0], sizes = [1, 48], strides = [1, 1]} : vector<4x48xf32> to vector<1x48xf32>
    %5 = vector.broadcast %3 : vector<128x1xf32> to vector<128x48xf32>
    %6 = vector.broadcast %4 : vector<1x48xf32> to vector<128x48xf32>
    %7 = arith.mulf %5, %6 : vector<128x48xf32>
    %8 = vector.broadcast %2 : vector<1x48xf32> to vector<128x48xf32>
    %9 = arith.addf %8, %7 : vector<128x48xf32>
    %10 = vector.extract_strided_slice %0 {offsets = [0, 1], sizes = [128, 1], strides = [1, 1]} : vector<128x4xf32> to vector<128x1xf32>
    %11 = vector.extract_strided_slice %1 {offsets = [1, 0], sizes = [1, 48], strides = [1, 1]} : vector<4x48xf32> to vector<1x48xf32>
    %12 = vector.broadcast %10 : vector<128x1xf32> to vector<128x48xf32>
    %13 = vector.broadcast %11 : vector<1x48xf32> to vector<128x48xf32>
    %14 = arith.mulf %12, %13 : vector<128x48xf32>
    %15 = arith.addf %9, %14 : vector<128x48xf32>
    %16 = vector.extract_strided_slice %0 {offsets = [0, 2], sizes = [128, 1], strides = [1, 1]} : vector<128x4xf32> to vector<128x1xf32>
    %17 = vector.extract_strided_slice %1 {offsets = [2, 0], sizes = [1, 48], strides = [1, 1]} : vector<4x48xf32> to vector<1x48xf32>
    %18 = vector.broadcast %16 : vector<128x1xf32> to vector<128x48xf32>
    %19 = vector.broadcast %17 : vector<1x48xf32> to vector<128x48xf32>
    %20 = arith.mulf %18, %19 : vector<128x48xf32>
    %21 = arith.addf %15, %20 : vector<128x48xf32>
    %22 = vector.extract_strided_slice %0 {offsets = [0, 3], sizes = [128, 1], strides = [1, 1]} : vector<128x4xf32> to vector<128x1xf32>
    %23 = vector.extract_strided_slice %1 {offsets = [3, 0], sizes = [1, 48], strides = [1, 1]} : vector<4x48xf32> to vector<1x48xf32>
    %24 = vector.broadcast %22 : vector<128x1xf32> to vector<128x48xf32>
    %25 = vector.broadcast %23 : vector<1x48xf32> to vector<128x48xf32>
    %26 = arith.mulf %24, %25 : vector<128x48xf32>
    %27 = arith.addf %21, %26 : vector<128x48xf32>
    %c0_5 = arith.constant 0 : index
    %c0_6 = arith.constant 0 : index
    %28 = vector.load %arg6[%c0_5, %c0_6] : memref<48x48xf32, #tpu.memory_space<vmem>>, vector<48x48xf32>
    %cst = arith.constant dense<0.000000e+00> : vector<128x48xf32>
    %29 = tpu.matmul %27, %28, %cst {dimension_numbers = #tpu.dot_dimension_numbers<[1], [0], [0], [1], [0, 0, 1, 1], [], []>} : vector<128x48xf32>, vector<48x48xf32>, vector<128x48xf32> -> vector<128x48xf32>
    %c0_7 = arith.constant 0 : index
    %c0_8 = arith.constant 0 : index
    %30 = vector.load %arg7[%c0_7, %c0_8] : memref<1x48xf32, #tpu.memory_space<vmem>>, vector<1x48xf32>
    %31 = vector.broadcast %30 : vector<1x48xf32> to vector<128x48xf32>
    %32 = arith.addf %29, %31 : vector<128x48xf32>
    %c0_9 = arith.constant 0 : index
    %c0_10 = arith.constant 0 : index
    %33 = vector.load %arg8[%c0_9, %c0_10] : memref<60x48xf32, #tpu.memory_space<vmem>>, vector<60x48xf32>
    %c0_11 = arith.constant 0 : index
    %c0_12 = arith.constant 0 : index
    %34 = vector.load %arg3[%c0_11, %c0_12] : memref<60x48xf32, #tpu.memory_space<vmem>>, vector<60x48xf32>
    %c0_13 = arith.constant 0 : index
    %c0_14 = arith.constant 0 : index
    %35 = vector.load %arg4[%c0_13, %c0_14] : memref<48x48xf32, #tpu.memory_space<vmem>>, vector<48x48xf32>
    %cst_15 = arith.constant dense<0.000000e+00> : vector<60x48xf32>
    %36 = tpu.matmul %34, %35, %cst_15 {dimension_numbers = #tpu.dot_dimension_numbers<[1], [0], [0], [1], [0, 0, 1, 1], [], []>} : vector<60x48xf32>, vector<48x48xf32>, vector<60x48xf32> -> vector<60x48xf32>
    %c0_16 = arith.constant 0 : index
    %c0_17 = arith.constant 0 : index
    %37 = vector.load %arg5[%c0_16, %c0_17] : memref<1x48xf32, #tpu.memory_space<vmem>>, vector<1x48xf32>
    %38 = vector.broadcast %37 : vector<1x48xf32> to vector<60x48xf32>
    %39 = arith.addf %36, %38 : vector<60x48xf32>
    %40 = arith.mulf %39, %33 : vector<60x48xf32>
    %c0_18 = arith.constant 0 : index
    %c0_19 = arith.constant 0 : index
    %41 = vector.load %arg9[%c0_18, %c0_19] : memref<1x48xf32, #tpu.memory_space<vmem>>, vector<1x48xf32>
    %c0_20 = arith.constant 0 : index
    %c0_21 = arith.constant 0 : index
    %42 = vector.load %arg10[%c0_20, %c0_21] : memref<1x48xf32, #tpu.memory_space<vmem>>, vector<1x48xf32>
    %c0_22 = arith.constant 0 : index
    %c0_23 = arith.constant 0 : index
    %43 = vector.load %arg11[%c0_22, %c0_23] : memref<10x48xf32, #tpu.memory_space<vmem>>, vector<10x48xf32>
    %c0_24 = arith.constant 0 : index
    %c0_25 = arith.constant 0 : index
    %44 = vector.load %arg13[%c0_24, %c0_25] : memref<10x48xf32, #tpu.memory_space<vmem>>, vector<10x48xf32>
    %45 = arith.subf %43, %44 : vector<10x48xf32>
    %c0_26 = arith.constant 0 : index
    %c0_27 = arith.constant 0 : index
    %46 = vector.load %arg12[%c0_26, %c0_27] : memref<10x1xf32, #tpu.memory_space<vmem>>, vector<10x1xf32>
    %c0_28 = arith.constant 0 : index
    %c0_29 = arith.constant 0 : index
    %47 = vector.load %arg14[%c0_28, %c0_29] : memref<10x1xf32, #tpu.memory_space<vmem>>, vector<10x1xf32>
    %48 = arith.subf %46, %47 : vector<10x1xf32>
    %49 = tpu.iota {dimensions = array<i32: 0>} : vector<10x10xi32>
    %50 = tpu.iota {dimensions = array<i32: 1>} : vector<10x10xi32>
    %51 = arith.cmpi eq, %49, %50 : vector<10x10xi32>
    %52 = arith.extui %51 : vector<10x10xi1> to vector<10x10xi32>
    %53 = arith.sitofp %52 : vector<10x10xi32> to vector<10x10xf32>
    %54 = vector.extract_strided_slice %32 {offsets = [0, 0], sizes = [64, 48], strides = [1, 1]} : vector<128x48xf32> to vector<64x48xf32>
    %55 = vector.extract_strided_slice %27 {offsets = [0, 0], sizes = [64, 48], strides = [1, 1]} : vector<128x48xf32> to vector<64x48xf32>
    %cst_30 = arith.constant dense<0.000000e+00> : vector<48xf32>
    %56 = vector.multi_reduction <add>, %55, %cst_30 [0] : vector<64x48xf32> to vector<48xf32>
    %57 = vector.shape_cast %56 : vector<48xf32> to vector<1x48xf32>
    %cst_31 = arith.constant 6.400000e+01 : f32
    %58 = vector.broadcast %cst_31 : f32 to vector<1x48xf32>
    %59 = arith.divf %57, %58 : vector<1x48xf32>
    %cst_32 = arith.constant dense<0.000000e+00> : vector<60x64xf32>
    %60 = tpu.matmul %40, %54, %cst_32 {dimension_numbers = #tpu.dot_dimension_numbers<[1], [1], [0], [0], [0, 0, 1, 0], [], []>} : vector<60x48xf32>, vector<64x48xf32>, vector<60x64xf32> -> vector<60x64xf32>
    %cst_33 = arith.constant 0.353553385 : f32
    %61 = vector.broadcast %cst_33 : f32 to vector<60x64xf32>
    %62 = arith.mulf %60, %61 : vector<60x64xf32>
    %cst_34 = arith.constant dense<0xFF800000> : vector<60xf32>
    %63 = vector.multi_reduction <maximumf>, %62, %cst_34 [1] : vector<60x64xf32> to vector<60xf32>
    %64 = vector.shape_cast %63 : vector<60xf32> to vector<60x1xf32>
    %65 = vector.broadcast %64 : vector<60x1xf32> to vector<60x64xf32>
    %66 = arith.subf %62, %65 : vector<60x64xf32>
    %67 = math.exp %66 : vector<60x64xf32>
    %cst_35 = arith.constant dense<0.000000e+00> : vector<60xf32>
    %68 = vector.multi_reduction <add>, %67, %cst_35 [1] : vector<60x64xf32> to vector<60xf32>
    %69 = vector.shape_cast %68 : vector<60xf32> to vector<60x1xf32>
    %70 = tpu.reciprocal %69 {approx = true} : vector<60x1xf32> -> vector<60x1xf32>
    %71 = vector.broadcast %70 : vector<60x1xf32> to vector<60x64xf32>
    %72 = arith.mulf %67, %71 : vector<60x64xf32>
    %cst_36 = arith.constant dense<0.000000e+00> : vector<60x48xf32>
    %73 = tpu.matmul %72, %55, %cst_36 {dimension_numbers = #tpu.dot_dimension_numbers<[1], [0], [0], [1], [0, 0, 1, 1], [], []>} : vector<60x64xf32>, vector<64x48xf32>, vector<60x48xf32> -> vector<60x48xf32>
    %74 = arith.mulf %73, %33 : vector<60x48xf32>
    %75 = vector.extract_strided_slice %74 {offsets = [0, 0], sizes = [10, 48], strides = [1, 1]} : vector<60x48xf32> to vector<10x48xf32>
    %76 = vector.extract_strided_slice %74 {offsets = [10, 0], sizes = [10, 48], strides = [1, 1]} : vector<60x48xf32> to vector<10x48xf32>
    %77 = arith.addf %75, %76 : vector<10x48xf32>
    %78 = vector.extract_strided_slice %74 {offsets = [20, 0], sizes = [10, 48], strides = [1, 1]} : vector<60x48xf32> to vector<10x48xf32>
    %79 = arith.addf %77, %78 : vector<10x48xf32>
    %80 = vector.extract_strided_slice %74 {offsets = [30, 0], sizes = [10, 48], strides = [1, 1]} : vector<60x48xf32> to vector<10x48xf32>
    %81 = arith.addf %79, %80 : vector<10x48xf32>
    %82 = vector.extract_strided_slice %74 {offsets = [40, 0], sizes = [10, 48], strides = [1, 1]} : vector<60x48xf32> to vector<10x48xf32>
    %83 = arith.addf %81, %82 : vector<10x48xf32>
    %84 = vector.extract_strided_slice %74 {offsets = [50, 0], sizes = [10, 48], strides = [1, 1]} : vector<60x48xf32> to vector<10x48xf32>
    %85 = arith.addf %83, %84 : vector<10x48xf32>
    %86 = vector.broadcast %59 : vector<1x48xf32> to vector<10x48xf32>
    %87 = arith.addf %86, %85 : vector<10x48xf32>
    %cst_37 = arith.constant dense<0.000000e+00> : vector<10xf32>
    %88 = vector.multi_reduction <add>, %87, %cst_37 [1] : vector<10x48xf32> to vector<10xf32>
    %89 = vector.shape_cast %88 : vector<10xf32> to vector<10x1xf32>
    %cst_38 = arith.constant 4.800000e+01 : f32
    %90 = vector.broadcast %cst_38 : f32 to vector<10x1xf32>
    %91 = arith.divf %89, %90 : vector<10x1xf32>
    %92 = vector.broadcast %91 : vector<10x1xf32> to vector<10x48xf32>
    %93 = arith.subf %87, %92 : vector<10x48xf32>
    %94 = arith.mulf %93, %93 : vector<10x48xf32>
    %cst_39 = arith.constant dense<0.000000e+00> : vector<10xf32>
    %95 = vector.multi_reduction <add>, %94, %cst_39 [1] : vector<10x48xf32> to vector<10xf32>
    %96 = vector.shape_cast %95 : vector<10xf32> to vector<10x1xf32>
    %cst_40 = arith.constant 4.800000e+01 : f32
    %97 = vector.broadcast %cst_40 : f32 to vector<10x1xf32>
    %98 = arith.divf %96, %97 : vector<10x1xf32>
    %99 = vector.broadcast %91 : vector<10x1xf32> to vector<10x48xf32>
    %100 = arith.subf %87, %99 : vector<10x48xf32>
    %cst_41 = arith.constant 9.99999997E-7 : f32
    %101 = vector.broadcast %cst_41 : f32 to vector<10x1xf32>
    %102 = arith.addf %98, %101 : vector<10x1xf32>
    %103 = math.rsqrt %102 : vector<10x1xf32>
    %104 = vector.broadcast %103 : vector<10x1xf32> to vector<10x48xf32>
    %105 = arith.mulf %100, %104 : vector<10x48xf32>
    %106 = vector.broadcast %41 : vector<1x48xf32> to vector<10x48xf32>
    %107 = arith.mulf %105, %106 : vector<10x48xf32>
    %108 = vector.broadcast %42 : vector<1x48xf32> to vector<10x48xf32>
    %109 = arith.addf %107, %108 : vector<10x48xf32>
    %c0_42 = arith.constant 0 : index
    %c0_43 = arith.constant 0 : index
    %c0_44 = arith.constant 0 : index
    %110 = vector.load %arg16[%c0_42, %c0_43, %c0_44] : memref<2x10x48xf32, #tpu.memory_space<vmem>>, vector<1x10x48xf32>
    %111 = vector.shape_cast %110 : vector<1x10x48xf32> to vector<10x48xf32>
    %112 = vector.shape_cast %109 : vector<10x48xf32> to vector<1x10x48xf32>
    tpu.vector_store %arg16[%c0_42, %c0_43, %c0_44], %112 {strides = array<i32>} : memref<2x10x48xf32, #tpu.memory_space<vmem>>, vector<1x10x48xf32>,
    %113 = arith.mulf %109, %45 : vector<10x48xf32>
    %cst_45 = arith.constant dense<0.000000e+00> : vector<10xf32>
    %114 = vector.multi_reduction <add>, %113, %cst_45 [1] : vector<10x48xf32> to vector<10xf32>
    %115 = vector.shape_cast %114 : vector<10xf32> to vector<10x1xf32>
    %116 = arith.addf %115, %48 : vector<10x1xf32>
    %117 = vector.broadcast %116 : vector<10x1xf32> to vector<10x10xf32>
    %118 = arith.mulf %117, %53 : vector<10x10xf32>
    %cst_46 = arith.constant dense<0.000000e+00> : vector<10xf32>
    %119 = vector.multi_reduction <add>, %118, %cst_46 [0] : vector<10x10xf32> to vector<10xf32>
    %120 = vector.shape_cast %119 : vector<10xf32> to vector<1x10xf32>
    %c0_47 = arith.constant 0 : index
    %c0_48 = arith.constant 0 : index
    %c0_49 = arith.constant 0 : index
    %121 = vector.load %arg15[%c0_47, %c0_48, %c0_49] : memref<2x1x10xf32, #tpu.memory_space<vmem>>, vector<1x1x10xf32>
    %122 = vector.shape_cast %121 : vector<1x1x10xf32> to vector<1x10xf32>
    %123 = vector.shape_cast %120 : vector<1x10xf32> to vector<1x1x10xf32>
    tpu.vector_store %arg15[%c0_47, %c0_48, %c0_49], %123 {strides = array<i32>} : memref<2x1x10xf32, #tpu.memory_space<vmem>>, vector<1x1x10xf32>,
    %124 = vector.extract_strided_slice %32 {offsets = [64, 0], sizes = [64, 48], strides = [1, 1]} : vector<128x48xf32> to vector<64x48xf32>
    %125 = vector.extract_strided_slice %27 {offsets = [64, 0], sizes = [64, 48], strides = [1, 1]} : vector<128x48xf32> to vector<64x48xf32>
    %cst_50 = arith.constant dense<0.000000e+00> : vector<48xf32>
    %126 = vector.multi_reduction <add>, %125, %cst_50 [0] : vector<64x48xf32> to vector<48xf32>
    %127 = vector.shape_cast %126 : vector<48xf32> to vector<1x48xf32>
    %cst_51 = arith.constant 6.400000e+01 : f32
    %128 = vector.broadcast %cst_51 : f32 to vector<1x48xf32>
    %129 = arith.divf %127, %128 : vector<1x48xf32>
    %cst_52 = arith.constant dense<0.000000e+00> : vector<60x64xf32>
    %130 = tpu.matmul %40, %124, %cst_52 {dimension_numbers = #tpu.dot_dimension_numbers<[1], [1], [0], [0], [0, 0, 1, 0], [], []>} : vector<60x48xf32>, vector<64x48xf32>, vector<60x64xf32> -> vector<60x64xf32>
    %cst_53 = arith.constant 0.353553385 : f32
    %131 = vector.broadcast %cst_53 : f32 to vector<60x64xf32>
    %132 = arith.mulf %130, %131 : vector<60x64xf32>
    %cst_54 = arith.constant dense<0xFF800000> : vector<60xf32>
    %133 = vector.multi_reduction <maximumf>, %132, %cst_54 [1] : vector<60x64xf32> to vector<60xf32>
    %134 = vector.shape_cast %133 : vector<60xf32> to vector<60x1xf32>
    %135 = vector.broadcast %134 : vector<60x1xf32> to vector<60x64xf32>
    %136 = arith.subf %132, %135 : vector<60x64xf32>
    %137 = math.exp %136 : vector<60x64xf32>
    %cst_55 = arith.constant dense<0.000000e+00> : vector<60xf32>
    %138 = vector.multi_reduction <add>, %137, %cst_55 [1] : vector<60x64xf32> to vector<60xf32>
    %139 = vector.shape_cast %138 : vector<60xf32> to vector<60x1xf32>
    %140 = tpu.reciprocal %139 {approx = true} : vector<60x1xf32> -> vector<60x1xf32>
    %141 = vector.broadcast %140 : vector<60x1xf32> to vector<60x64xf32>
    %142 = arith.mulf %137, %141 : vector<60x64xf32>
    %cst_56 = arith.constant dense<0.000000e+00> : vector<60x48xf32>
    %143 = tpu.matmul %142, %125, %cst_56 {dimension_numbers = #tpu.dot_dimension_numbers<[1], [0], [0], [1], [0, 0, 1, 1], [], []>} : vector<60x64xf32>, vector<64x48xf32>, vector<60x48xf32> -> vector<60x48xf32>
    %144 = arith.mulf %143, %33 : vector<60x48xf32>
    %145 = vector.extract_strided_slice %144 {offsets = [0, 0], sizes = [10, 48], strides = [1, 1]} : vector<60x48xf32> to vector<10x48xf32>
    %146 = vector.extract_strided_slice %144 {offsets = [10, 0], sizes = [10, 48], strides = [1, 1]} : vector<60x48xf32> to vector<10x48xf32>
    %147 = arith.addf %145, %146 : vector<10x48xf32>
    %148 = vector.extract_strided_slice %144 {offsets = [20, 0], sizes = [10, 48], strides = [1, 1]} : vector<60x48xf32> to vector<10x48xf32>
    %149 = arith.addf %147, %148 : vector<10x48xf32>
    %150 = vector.extract_strided_slice %144 {offsets = [30, 0], sizes = [10, 48], strides = [1, 1]} : vector<60x48xf32> to vector<10x48xf32>
    %151 = arith.addf %149, %150 : vector<10x48xf32>
    %152 = vector.extract_strided_slice %144 {offsets = [40, 0], sizes = [10, 48], strides = [1, 1]} : vector<60x48xf32> to vector<10x48xf32>
    %153 = arith.addf %151, %152 : vector<10x48xf32>
    %154 = vector.extract_strided_slice %144 {offsets = [50, 0], sizes = [10, 48], strides = [1, 1]} : vector<60x48xf32> to vector<10x48xf32>
    %155 = arith.addf %153, %154 : vector<10x48xf32>
    %156 = vector.broadcast %129 : vector<1x48xf32> to vector<10x48xf32>
    %157 = arith.addf %156, %155 : vector<10x48xf32>
    %cst_57 = arith.constant dense<0.000000e+00> : vector<10xf32>
    %158 = vector.multi_reduction <add>, %157, %cst_57 [1] : vector<10x48xf32> to vector<10xf32>
    %159 = vector.shape_cast %158 : vector<10xf32> to vector<10x1xf32>
    %cst_58 = arith.constant 4.800000e+01 : f32
    %160 = vector.broadcast %cst_58 : f32 to vector<10x1xf32>
    %161 = arith.divf %159, %160 : vector<10x1xf32>
    %162 = vector.broadcast %161 : vector<10x1xf32> to vector<10x48xf32>
    %163 = arith.subf %157, %162 : vector<10x48xf32>
    %164 = arith.mulf %163, %163 : vector<10x48xf32>
    %cst_59 = arith.constant dense<0.000000e+00> : vector<10xf32>
    %165 = vector.multi_reduction <add>, %164, %cst_59 [1] : vector<10x48xf32> to vector<10xf32>
    %166 = vector.shape_cast %165 : vector<10xf32> to vector<10x1xf32>
    %cst_60 = arith.constant 4.800000e+01 : f32
    %167 = vector.broadcast %cst_60 : f32 to vector<10x1xf32>
    %168 = arith.divf %166, %167 : vector<10x1xf32>
    %169 = vector.broadcast %161 : vector<10x1xf32> to vector<10x48xf32>
    %170 = arith.subf %157, %169 : vector<10x48xf32>
    %cst_61 = arith.constant 9.99999997E-7 : f32
    %171 = vector.broadcast %cst_61 : f32 to vector<10x1xf32>
    %172 = arith.addf %168, %171 : vector<10x1xf32>
    %173 = math.rsqrt %172 : vector<10x1xf32>
    %174 = vector.broadcast %173 : vector<10x1xf32> to vector<10x48xf32>
    %175 = arith.mulf %170, %174 : vector<10x48xf32>
    %176 = vector.broadcast %41 : vector<1x48xf32> to vector<10x48xf32>
    %177 = arith.mulf %175, %176 : vector<10x48xf32>
    %178 = vector.broadcast %42 : vector<1x48xf32> to vector<10x48xf32>
    %179 = arith.addf %177, %178 : vector<10x48xf32>
    %c1 = arith.constant 1 : index
    %c0_62 = arith.constant 0 : index
    %c0_63 = arith.constant 0 : index
    %180 = vector.load %arg16[%c1, %c0_62, %c0_63] : memref<2x10x48xf32, #tpu.memory_space<vmem>>, vector<1x10x48xf32>
    %181 = vector.shape_cast %180 : vector<1x10x48xf32> to vector<10x48xf32>
    %182 = vector.shape_cast %179 : vector<10x48xf32> to vector<1x10x48xf32>
    tpu.vector_store %arg16[%c1, %c0_62, %c0_63], %182 {strides = array<i32>} : memref<2x10x48xf32, #tpu.memory_space<vmem>>, vector<1x10x48xf32>,
    %183 = arith.mulf %179, %45 : vector<10x48xf32>
    %cst_64 = arith.constant dense<0.000000e+00> : vector<10xf32>
    %184 = vector.multi_reduction <add>, %183, %cst_64 [1] : vector<10x48xf32> to vector<10xf32>
    %185 = vector.shape_cast %184 : vector<10xf32> to vector<10x1xf32>
    %186 = arith.addf %185, %48 : vector<10x1xf32>
    %187 = vector.broadcast %186 : vector<10x1xf32> to vector<10x10xf32>
    %188 = arith.mulf %187, %53 : vector<10x10xf32>
    %cst_65 = arith.constant dense<0.000000e+00> : vector<10xf32>
    %189 = vector.multi_reduction <add>, %188, %cst_65 [0] : vector<10x10xf32> to vector<10xf32>
    %190 = vector.shape_cast %189 : vector<10xf32> to vector<1x10xf32>
    %c1_66 = arith.constant 1 : index
    %c0_67 = arith.constant 0 : index
    %c0_68 = arith.constant 0 : index
    %191 = vector.load %arg15[%c1_66, %c0_67, %c0_68] : memref<2x1x10xf32, #tpu.memory_space<vmem>>, vector<1x1x10xf32>
    %192 = vector.shape_cast %191 : vector<1x1x10xf32> to vector<1x10xf32>
    %193 = vector.shape_cast %190 : vector<1x10xf32> to vector<1x1x10xf32>
    tpu.vector_store %arg15[%c1_66, %c0_67, %c0_68], %193 {strides = array<i32>} : memref<2x1x10xf32, #tpu.memory_space<vmem>>, vector<1x1x10xf32>,
    return
  }
}

</mosaic_0001>

<llo_original>
// kernel: tile.9
$region0: #{tile.9}
  %s0 = inlined_call_operand.vmem [shape: f32[6,10,48], index: 0, kind: input, shape index: {}]
  %s1 = inlined_call_operand.vmem [shape: f32[60,48], index: 1, kind: output, shape index: {}]
  %v2 = vld [vmem:[%s0] sm:$0xff]
  %vm3 = vcmask 392192
  %4 = vst.msk [vmem:[%s1] sm:$0xff] %vm3, %v2
  %s5 = scalar_lea.vmem %s0, 8
  %v6 = vld [vmem:[%s5] sm:$0x3]
  %vm7 = vcmask 392192
  %s8 = scalar_lea.vmem %s1, 8
  %9 = vst.msk [vmem:[%s8] sm:$0x3] %vm7, %v6
  %s10 = scalar_lea.vmem %s0, 16
  %v11 = vld [vmem:[%s10] sm:$0xff]
  %vm12 = vcmask 392192
  %s13 = scalar_lea.vmem %s1, 10
  %14 = vst.msk [vmem:[%s13] sm:$0xff] %vm12, %v11
  %s15 = scalar_lea.vmem %s0, 24
  %v16 = vld [vmem:[%s15] sm:$0x3]
  %vm17 = vcmask 392192
  %s18 = scalar_lea.vmem %s1, 18
  %19 = vst.msk [vmem:[%s18] sm:$0x3] %vm17, %v16
  %s20 = scalar_lea.vmem %s0, 32
  %v21 = vld [vmem:[%s20] sm:$0xff]
  %vm22 = vcmask 392192
  %s23 = scalar_lea.vmem %s1, 20
  %24 = vst.msk [vmem:[%s23] sm:$0xff] %vm22, %v21
  %s25 = scalar_lea.vmem %s0, 40
  %v26 = vld [vmem:[%s25] sm:$0x3]
  %vm27 = vcmask 392192
  %s28 = scalar_lea.vmem %s1, 28
  %29 = vst.msk [vmem:[%s28] sm:$0x3] %vm27, %v26
  %s30 = scalar_lea.vmem %s0, 48
  %v31 = vld [vmem:[%s30] sm:$0xff]
  %vm32 = vcmask 392192
  %s33 = scalar_lea.vmem %s1, 30
  %34 = vst.msk [vmem:[%s33] sm:$0xff] %vm32, %v31
  %s35 = scalar_lea.vmem %s0, 56
  %v36 = vld [vmem:[%s35] sm:$0x3]
  %vm37 = vcmask 392192
  %s38 = scalar_lea.vmem %s1, 38
  %39 = vst.msk [vmem:[%s38] sm:$0x3] %vm37, %v36
  %s40 = scalar_lea.vmem %s0, 64
  %v41 = vld [vmem:[%s40] sm:$0xff]
  %vm42 = vcmask 392192
  %s43 = scalar_lea.vmem %s1, 40
  %44 = vst.msk [vmem:[%s43] sm:$0xff] %vm42, %v41
  %s45 = scalar_lea.vmem %s0, 72
  %v46 = vld [vmem:[%s45] sm:$0x3]
  %vm47 = vcmask 392192
  %s48 = scalar_lea.vmem %s1, 48
  %49 = vst.msk [vmem:[%s48] sm:$0x3] %vm47, %v46
  %s50 = scalar_lea.vmem %s0, 80
  %v51 = vld [vmem:[%s50] sm:$0xff]
  %vm52 = vcmask 392192
  %s53 = scalar_lea.vmem %s1, 50
  %54 = vst.msk [vmem:[%s53] sm:$0xff] %vm52, %v51
  %s55 = scalar_lea.vmem %s0, 88
  %v56 = vld [vmem:[%s55] sm:$0x3]
  %vm57 = vcmask 392192
  %s58 = scalar_lea.vmem %s1, 58
  %59 = vst.msk [vmem:[%s58] sm:$0x3] %vm57, %v56

// kernel: vitnet_forward.1
$region0: #{vitnet_forward.1}
  #allocation0 [shape = 'u32[]', space=smem, size = 0x4, offset = 0x4, fixed_abs, tag = 'smem constant byte address 0x4 - core index']
  #allocation1 [shape = 'u32[72,128]{1,0:T(1,128)}', space=vmem, size = 0x9000, scoped, tag = 'internal scratch']
  %s0 = inlined_call_operand.vmem [shape: f32[128,4], index: 0, kind: input, shape index: {}]
  %s1 = inlined_call_operand.vmem [shape: f32[4,48], index: 1, kind: input, shape index: {}]
  %s2 = inlined_call_operand.vmem [shape: f32[1,48], index: 2, kind: input, shape index: {}]
  %s3 = inlined_call_operand.vmem [shape: f32[60,48], index: 3, kind: input, shape index: {}]
  %s4 = inlined_call_operand.vmem [shape: f32[48,48], index: 4, kind: input, shape index: {}]
  %s5 = inlined_call_operand.vmem [shape: f32[1,48], index: 5, kind: input, shape index: {}]
  %s6 = inlined_call_operand.vmem [shape: f32[48,48], index: 6, kind: input, shape index: {}]
  %s7 = inlined_call_operand.vmem [shape: f32[1,48], index: 7, kind: input, shape index: {}]
  %s8 = inlined_call_operand.vmem [shape: f32[60,48], index: 8, kind: input, shape index: {}]
  %s9 = inlined_call_operand.vmem [shape: f32[1,48], index: 9, kind: input, shape index: {}]
  %s10 = inlined_call_operand.vmem [shape: f32[1,48], index: 10, kind: input, shape index: {}]
  %s11 = inlined_call_operand.vmem [shape: f32[10,48], index: 11, kind: input, shape index: {}]
  %s12 = inlined_call_operand.vmem [shape: f32[10,1], index: 12, kind: input, shape index: {}]
  %s13 = inlined_call_operand.vmem [shape: f32[10,48], index: 13, kind: input, shape index: {}]
  %s14 = inlined_call_operand.vmem [shape: f32[10,1], index: 14, kind: input, shape index: {}]
  %s15 = inlined_call_operand.hbm [shape: f32[2,1,10], index: 15, kind: output, shape index: {0}]
  %s16 = inlined_call_operand.vmem [shape: f32[2,10,48], index: 16, kind: output, shape index: {1}]
  %17 = xla_tuple %s15, %s16
  %s18 = sld [smem:[#allocation0]]
  $region78: #{vitnet_forward.1} parent=0
    _
  %s20 = ssub.s32 1, %s18
  %s21 = scalar_select 0, %s20, %s18
  $region1: #{vitnet_forward.1} parent=0
    #allocation2 [shape = 'u8[1024]{0}', space=vmem, size = 0x400, scoped, tag = 'output window, operand 0, single buffered']
    #allocation3 [shape = 's32[1]{0}', space=sflag, size = 0x4, scoped, tag = 'scoped memory for vitnet_forward.1']
    %22 = vsyncpa [#allocation3], 0
    // Predicated region
    $region2: #{vitnet_forward.1} parent=1 // pred_check
      _
    $region3: #{vitnet_forward.1} parent=1 // pred_check_branch
      %24 = sbr.rel (0) target = $region5
    $region4: #{vitnet_forward.1} parent=1 // pred_region
      _
    $region5: #{vitnet_forward.1} parent=1 // pred_fallthru
      _
    // Predicated region
    $region6: #{vitnet_forward.1} parent=1 // pred_check
      _
    $region7: #{vitnet_forward.1} parent=1 // pred_check_branch
      %26 = sbr.rel (0) target = $region9
    $region8: #{vitnet_forward.1} parent=1 // pred_region
      _
    $region9: #{vitnet_forward.1} parent=1 // pred_fallthru
      _
    // Predicated region
    $region10: #{vitnet_forward.1} parent=1 // pred_check
      _
    $region11: #{vitnet_forward.1} parent=1 // pred_check_branch
      %28 = sbr.rel (0) target = $region13
    $region12: #{vitnet_forward.1} parent=1 // pred_region
      _
    $region13: #{vitnet_forward.1} parent=1 // pred_fallthru
      _
    // Predicated region
    $region14: #{vitnet_forward.1} parent=1 // pred_check
      _
    $region15: #{vitnet_forward.1} parent=1 // pred_check_branch
      %30 = sbr.rel (0) target = $region17
    $region16: #{vitnet_forward.1} parent=1 // pred_region
      _
    $region17: #{vitnet_forward.1} parent=1 // pred_fallthru
      _
    // Predicated region
    $region18: #{vitnet_forward.1} parent=1 // pred_check
      _
    $region19: #{vitnet_forward.1} parent=1 // pred_check_branch
      %32 = sbr.rel (0) target = $region21
    $region20: #{vitnet_forward.1} parent=1 // pred_region
      _
    $region21: #{vitnet_forward.1} parent=1 // pred_fallthru
      _
    // Predicated region
    $region22: #{vitnet_forward.1} parent=1 // pred_check
      _
    $region23: #{vitnet_forward.1} parent=1 // pred_check_branch
      %34 = sbr.rel (0) target = $region25
    $region24: #{vitnet_forward.1} parent=1 // pred_region
      _
    $region25: #{vitnet_forward.1} parent=1 // pred_fallthru
      _
    // Predicated region
    $region26: #{vitnet_forward.1} parent=1 // pred_check
      _
    $region27: #{vitnet_forward.1} parent=1 // pred_check_branch
      %36 = sbr.rel (0) target = $region29
    $region28: #{vitnet_forward.1} parent=1 // pred_region
      _
    $region29: #{vitnet_forward.1} parent=1 // pred_fallthru
      _
    // Predicated region
    $region30: #{vitnet_forward.1} parent=1 // pred_check
      _
    $region31: #{vitnet_forward.1} parent=1 // pred_check_branch
      %38 = sbr.rel (0) target = $region33
    $region32: #{vitnet_forward.1} parent=1 // pred_region
      _
    $region33: #{vitnet_forward.1} parent=1 // pred_fallthru
      _
    // Predicated region
    $region34: #{vitnet_forward.1} parent=1 // pred_check
      _
    $region35: #{vitnet_forward.1} parent=1 // pred_check_branch
      %40 = sbr.rel (0) target = $region37
    $region36: #{vitnet_forward.1} parent=1 // pred_region
      _
    $region37: #{vitnet_forward.1} parent=1 // pred_fallthru
      _
    // Predicated region
    $region38: #{vitnet_forward.1} parent=1 // pred_check
      _
    $region39: #{vitnet_forward.1} parent=1 // pred_check_branch
      %42 = sbr.rel (0) target = $region41
    $region40: #{vitnet_forward.1} parent=1 // pred_region
      _
    $region41: #{vitnet_forward.1} parent=1 // pred_fallthru
      _
    // Predicated region
    $region42: #{vitnet_forward.1} parent=1 // pred_check
      _
    $region43: #{vitnet_forward.1} parent=1 // pred_check_branch
      %44 = sbr.rel (0) target = $region45
    $region44: #{vitnet_forward.1} parent=1 // pred_region
      _
    $region45: #{vitnet_forward.1} parent=1 // pred_fallthru
      _
    // Predicated region
    $region46: #{vitnet_forward.1} parent=1 // pred_check
      _
    $region47: #{vitnet_forward.1} parent=1 // pred_check_branch
      %46 = sbr.rel (0) target = $region49
    $region48: #{vitnet_forward.1} parent=1 // pred_region
      _
    $region49: #{vitnet_forward.1} parent=1 // pred_fallthru
      _
    // Predicated region
    $region50: #{vitnet_forward.1} parent=1 // pred_check
      _
    $region51: #{vitnet_forward.1} parent=1 // pred_check_branch
      %48 = sbr.rel (0) target = $region53
    $region52: #{vitnet_forward.1} parent=1 // pred_region
      _
    $region53: #{vitnet_forward.1} parent=1 // pred_fallthru
      _
    // Predicated region
    $region54: #{vitnet_forward.1} parent=1 // pred_check
      _
    $region55: #{vitnet_forward.1} parent=1 // pred_check_branch
      %50 = sbr.rel (0) target = $region57
    $region56: #{vitnet_forward.1} parent=1 // pred_region
      _
    $region57: #{vitnet_forward.1} parent=1 // pred_fallthru
      _
    // Predicated region
    $region58: #{vitnet_forward.1} parent=1 // pred_check
      _
    $region59: #{vitnet_forward.1} parent=1 // pred_check_branch
      %52 = sbr.rel (0) target = $region61
    $region60: #{vitnet_forward.1} parent=1 // pred_region
      _
    $region61: #{vitnet_forward.1} parent=1 // pred_fallthru
      _
    %v53 = vld [vmem:[%s0] sm:$0xff]
    %v54 = vld [vmem:[%s0 + $0x8] sm:$0xff]
    %v55 = vld [vmem:[%s0 + $0x10] sm:$0xff]
    %v56 = vld [vmem:[%s0 + $0x18] sm:$0xff]
    %v57 = vld [vmem:[%s0 + $0x20] sm:$0xff]
    %v58 = vld [vmem:[%s0 + $0x28] sm:$0xff]
    %v59 = vld [vmem:[%s0 + $0x30] sm:$0xff]
    %v60 = vld [vmem:[%s0 + $0x38] sm:$0xff]
    %v61 = vld [vmem:[%s0 + $0x40] sm:$0xff]
    %v62 = vld [vmem:[%s0 + $0x48] sm:$0xff]
    %v63 = vld [vmem:[%s0 + $0x50] sm:$0xff]
    %v64 = vld [vmem:[%s0 + $0x58] sm:$0xff]
    %v65 = vld [vmem:[%s0 + $0x60] sm:$0xff]
    %v66 = vld [vmem:[%s0 + $0x68] sm:$0xff]
    %v67 = vld [vmem:[%s0 + $0x70] sm:$0xff]
    %v68 = vld [vmem:[%s0 + $0x78] sm:$0xff]
    %v69 = vld [vmem:[%s1] sm:$0xf]
    %v70 = vld [vmem:[%s2] sm:$0x1]
    %72 = vset.pattern.permute.xlu0 0
    %73 = vperm.xlu0 %72, %v53
    %v74 = vpop.permute.xlu0 %73
    %77 = vset.pattern.permute.xlu0 0
    %78 = vperm.xlu0 %77, %v54
    %v79 = vpop.permute.xlu0 %78
    %82 = vset.pattern.permute.xlu0 0
    %83 = vperm.xlu0 %82, %v55
    %v84 = vpop.permute.xlu0 %83
    %87 = vset.pattern.permute.xlu0 0
    %88 = vperm.xlu0 %87, %v56
    %v89 = vpop.permute.xlu0 %88
    %92 = vset.pattern.permute.xlu0 0
    %93 = vperm.xlu0 %92, %v57
    %v94 = vpop.permute.xlu0 %93
    %97 = vset.pattern.permute.xlu0 0
    %98 = vperm.xlu0 %97, %v58
    %v99 = vpop.permute.xlu0 %98
    %102 = vset.pattern.permute.xlu0 0
    %103 = vperm.xlu0 %102, %v59
    %v104 = vpop.permute.xlu0 %103
    %107 = vset.pattern.permute.xlu0 0
    %108 = vperm.xlu0 %107, %v60
    %v109 = vpop.permute.xlu0 %108
    %112 = vset.pattern.permute.xlu0 0
    %113 = vperm.xlu0 %112, %v61
    %v114 = vpop.permute.xlu0 %113
    %117 = vset.pattern.permute.xlu0 0
    %118 = vperm.xlu0 %117, %v62
    %v119 = vpop.permute.xlu0 %118
    %122 = vset.pattern.permute.xlu0 0
    %123 = vperm.xlu0 %122, %v63
    %v124 = vpop.permute.xlu0 %123
    %127 = vset.pattern.permute.xlu0 0
    %128 = vperm.xlu0 %127, %v64
    %v129 = vpop.permute.xlu0 %128
    %132 = vset.pattern.permute.xlu0 0
    %133 = vperm.xlu0 %132, %v65
    %v134 = vpop.permute.xlu0 %133
    %137 = vset.pattern.permute.xlu0 0
    %138 = vperm.xlu0 %137, %v66
    %v139 = vpop.permute.xlu0 %138
    %142 = vset.pattern.permute.xlu0 0
    %143 = vperm.xlu0 %142, %v67
    %v144 = vpop.permute.xlu0 %143
    %147 = vset.pattern.permute.xlu0 0
    %148 = vperm.xlu0 %147, %v68
    %v149 = vpop.permute.xlu0 %148
    %v151 = vperm.slane %v69, 0
    %v152 = vmul.f32 %v74, %v151
    %v153 = vmul.f32 %v79, %v151
    %v154 = vmul.f32 %v84, %v151
    %v155 = vmul.f32 %v89, %v151
    %v156 = vmul.f32 %v94, %v151
    %v157 = vmul.f32 %v99, %v151
    %v158 = vmul.f32 %v104, %v151
    %v159 = vmul.f32 %v109, %v151
    %v160 = vmul.f32 %v114, %v151
    %v161 = vmul.f32 %v119, %v151
    %v162 = vmul.f32 %v124, %v151
    %v163 = vmul.f32 %v129, %v151
    %v164 = vmul.f32 %v134, %v151
    %v165 = vmul.f32 %v139, %v151
    %v166 = vmul.f32 %v144, %v151
    %v167 = vmul.f32 %v149, %v151
    %v169 = vperm.slane %v70, 0
    %v171 = vadd.f32 %v169, %v152
    %v172 = vadd.f32 %v169, %v153
    %v173 = vadd.f32 %v169, %v154
    %v174 = vadd.f32 %v169, %v155
    %v175 = vadd.f32 %v169, %v156
    %v176 = vadd.f32 %v169, %v157
    %v177 = vadd.f32 %v169, %v158
    %v178 = vadd.f32 %v169, %v159
    %v179 = vadd.f32 %v169, %v160
    %v180 = vadd.f32 %v169, %v161
    %v181 = vadd.f32 %v169, %v162
    %v182 = vadd.f32 %v169, %v163
    %v183 = vadd.f32 %v169, %v164
    %v184 = vadd.f32 %v169, %v165
    %v185 = vadd.f32 %v169, %v166
    %v186 = vadd.f32 %v169, %v167
    %187 = vset.pattern.permute.xlu0 1
    %188 = vperm.xlu0 %187, %v53
    %v189 = vpop.permute.xlu0 %188
    %191 = vset.pattern.permute.xlu0 1
    %192 = vperm.xlu0 %191, %v54
    %v193 = vpop.permute.xlu0 %192
    %195 = vset.pattern.permute.xlu0 1
    %196 = vperm.xlu0 %195, %v55
    %v197 = vpop.permute.xlu0 %196
    %199 = vset.pattern.permute.xlu0 1
    %200 = vperm.xlu0 %199, %v56
    %v201 = vpop.permute.xlu0 %200
    %203 = vset.pattern.permute.xlu0 1
    %204 = vperm.xlu0 %203, %v57
    %v205 = vpop.permute.xlu0 %204
    %207 = vset.pattern.permute.xlu0 1
    %208 = vperm.xlu0 %207, %v58
    %v209 = vpop.permute.xlu0 %208
    %211 = vset.pattern.permute.xlu0 1
    %212 = vperm.xlu0 %211, %v59
    %v213 = vpop.permute.xlu0 %212
    %215 = vset.pattern.permute.xlu0 1
    %216 = vperm.xlu0 %215, %v60
    %v217 = vpop.permute.xlu0 %216
    %219 = vset.pattern.permute.xlu0 1
    %220 = vperm.xlu0 %219, %v61
    %v221 = vpop.permute.xlu0 %220
    %223 = vset.pattern.permute.xlu0 1
    %224 = vperm.xlu0 %223, %v62
    %v225 = vpop.permute.xlu0 %224
    %227 = vset.pattern.permute.xlu0 1
    %228 = vperm.xlu0 %227, %v63
    %v229 = vpop.permute.xlu0 %228
    %231 = vset.pattern.permute.xlu0 1
    %232 = vperm.xlu0 %231, %v64
    %v233 = vpop.permute.xlu0 %232
    %235 = vset.pattern.permute.xlu0 1
    %236 = vperm.xlu0 %235, %v65
    %v237 = vpop.permute.xlu0 %236
    %239 = vset.pattern.permute.xlu0 1
    %240 = vperm.xlu0 %239, %v66
    %v241 = vpop.permute.xlu0 %240
    %243 = vset.pattern.permute.xlu0 1
    %244 = vperm.xlu0 %243, %v67
    %v245 = vpop.permute.xlu0 %244
    %247 = vset.pattern.permute.xlu0 1
    %248 = vperm.xlu0 %247, %v68
    %v249 = vpop.permute.xlu0 %248
    %v251 = vperm.slane %v69, 1
    %v252 = vmul.f32 %v189, %v251
    %v253 = vmul.f32 %v193, %v251
    %v254 = vmul.f32 %v197, %v251
    %v255 = vmul.f32 %v201, %v251
    %v256 = vmul.f32 %v205, %v251
    %v257 = vmul.f32 %v209, %v251
    %v258 = vmul.f32 %v213, %v251
    %v259 = vmul.f32 %v217, %v251
    %v260 = vmul.f32 %v221, %v251
    %v261 = vmul.f32 %v225, %v251
    %v262 = vmul.f32 %v229, %v251
    %v263 = vmul.f32 %v233, %v251
    %v264 = vmul.f32 %v237, %v251
    %v265 = vmul.f32 %v241, %v251
    %v266 = vmul.f32 %v245, %v251
    %v267 = vmul.f32 %v249, %v251
    %v268 = vadd.f32 %v171, %v252
    %v269 = vadd.f32 %v172, %v253
    %v270 = vadd.f32 %v173, %v254
    %v271 = vadd.f32 %v174, %v255
    %v272 = vadd.f32 %v175, %v256
    %v273 = vadd.f32 %v176, %v257
    %v274 = vadd.f32 %v177, %v258
    %v275 = vadd.f32 %v178, %v259
    %v276 = vadd.f32 %v179, %v260
    %v277 = vadd.f32 %v180, %v261
    %v278 = vadd.f32 %v181, %v262
    %v279 = vadd.f32 %v182, %v263
    %v280 = vadd.f32 %v183, %v264
    %v281 = vadd.f32 %v184, %v265
    %v282 = vadd.f32 %v185, %v266
    %v283 = vadd.f32 %v186, %v267
    %284 = vset.pattern.permute.xlu0 2
    %285 = vperm.xlu0 %284, %v53
    %v286 = vpop.permute.xlu0 %285
    %288 = vset.pattern.permute.xlu0 2
    %289 = vperm.xlu0 %288, %v54
    %v290 = vpop.permute.xlu0 %289
    %292 = vset.pattern.permute.xlu0 2
    %293 = vperm.xlu0 %292, %v55
    %v294 = vpop.permute.xlu0 %293
    %296 = vset.pattern.permute.xlu0 2
    %297 = vperm.xlu0 %296, %v56
    %v298 = vpop.permute.xlu0 %297
    %300 = vset.pattern.permute.xlu0 2
    %301 = vperm.xlu0 %300, %v57
    %v302 = vpop.permute.xlu0 %301
    %304 = vset.pattern.permute.xlu0 2
    %305 = vperm.xlu0 %304, %v58
    %v306 = vpop.permute.xlu0 %305
    %308 = vset.pattern.permute.xlu0 2
    %309 = vperm.xlu0 %308, %v59
    %v310 = vpop.permute.xlu0 %309
    %312 = vset.pattern.permute.xlu0 2
    %313 = vperm.xlu0 %312, %v60
    %v314 = vpop.permute.xlu0 %313
    %316 = vset.pattern.permute.xlu0 2
    %317 = vperm.xlu0 %316, %v61
    %v318 = vpop.permute.xlu0 %317
    %320 = vset.pattern.permute.xlu0 2
    %321 = vperm.xlu0 %320, %v62
    %v322 = vpop.permute.xlu0 %321
    %324 = vset.pattern.permute.xlu0 2
    %325 = vperm.xlu0 %324, %v63
    %v326 = vpop.permute.xlu0 %325
    %328 = vset.pattern.permute.xlu0 2
    %329 = vperm.xlu0 %328, %v64
    %v330 = vpop.permute.xlu0 %329
    %332 = vset.pattern.permute.xlu0 2
    %333 = vperm.xlu0 %332, %v65
    %v334 = vpop.permute.xlu0 %333
    %336 = vset.pattern.permute.xlu0 2
    %337 = vperm.xlu0 %336, %v66
    %v338 = vpop.permute.xlu0 %337
    %340 = vset.pattern.permute.xlu0 2
    %341 = vperm.xlu0 %340, %v67
    %v342 = vpop.permute.xlu0 %341
    %344 = vset.pattern.permute.xlu0 2
    %345 = vperm.xlu0 %344, %v68
    %v346 = vpop.permute.xlu0 %345
    %v348 = vperm.slane %v69, 2
    %v349 = vmul.f32 %v286, %v348
    %v350 = vmul.f32 %v290, %v348
    %v351 = vmul.f32 %v294, %v348
    %v352 = vmul.f32 %v298, %v348
    %v353 = vmul.f32 %v302, %v348
    %v354 = vmul.f32 %v306, %v348
    %v355 = vmul.f32 %v310, %v348
    %v356 = vmul.f32 %v314, %v348
    %v357 = vmul.f32 %v318, %v348
    %v358 = vmul.f32 %v322, %v348
    %v359 = vmul.f32 %v326, %v348
    %v360 = vmul.f32 %v330, %v348
    %v361 = vmul.f32 %v334, %v348
    %v362 = vmul.f32 %v338, %v348
    %v363 = vmul.f32 %v342, %v348
    %v364 = vmul.f32 %v346, %v348
    %v365 = vadd.f32 %v268, %v349
    %v366 = vadd.f32 %v269, %v350
    %v367 = vadd.f32 %v270, %v351
    %v368 = vadd.f32 %v271, %v352
    %v369 = vadd.f32 %v272, %v353
    %v370 = vadd.f32 %v273, %v354
    %v371 = vadd.f32 %v274, %v355
    %v372 = vadd.f32 %v275, %v356
    %v373 = vadd.f32 %v276, %v357
    %v374 = vadd.f32 %v277, %v358
    %v375 = vadd.f32 %v278, %v359
    %v376 = vadd.f32 %v279, %v360
    %v377 = vadd.f32 %v280, %v361
    %v378 = vadd.f32 %v281, %v362
    %v379 = vadd.f32 %v282, %v363
    %v380 = vadd.f32 %v283, %v364
    %381 = vset.pattern.permute.xlu0 3
    %382 = vperm.xlu0 %381, %v53
    %v383 = vpop.permute.xlu0 %382
    %385 = vset.pattern.permute.xlu0 3
    %386 = vperm.xlu0 %385, %v54
    %v387 = vpop.permute.xlu0 %386
    %389 = vset.pattern.permute.xlu0 3
    %390 = vperm.xlu0 %389, %v55
    %v391 = vpop.permute.xlu0 %390
    %393 = vset.pattern.permute.xlu0 3
    %394 = vperm.xlu0 %393, %v56
    %v395 = vpop.permute.xlu0 %394
    %397 = vset.pattern.permute.xlu0 3
    %398 = vperm.xlu0 %397, %v57
    %v399 = vpop.permute.xlu0 %398
    %401 = vset.pattern.permute.xlu0 3
    %402 = vperm.xlu0 %401, %v58
    %v403 = vpop.permute.xlu0 %402
    %405 = vset.pattern.permute.xlu0 3
    %406 = vperm.xlu0 %405, %v59
    %v407 = vpop.permute.xlu0 %406
    %409 = vset.pattern.permute.xlu0 3
    %410 = vperm.xlu0 %409, %v60
    %v411 = vpop.permute.xlu0 %410
    %413 = vset.pattern.permute.xlu0 3
    %414 = vperm.xlu0 %413, %v61
    %v415 = vpop.permute.xlu0 %414
    %417 = vset.pattern.permute.xlu0 3
    %418 = vperm.xlu0 %417, %v62
    %v419 = vpop.permute.xlu0 %418
    %421 = vset.pattern.permute.xlu0 3
    %422 = vperm.xlu0 %421, %v63
    %v423 = vpop.permute.xlu0 %422
    %425 = vset.pattern.permute.xlu0 3
    %426 = vperm.xlu0 %425, %v64
    %v427 = vpop.permute.xlu0 %426
    %429 = vset.pattern.permute.xlu0 3
    %430 = vperm.xlu0 %429, %v65
    %v431 = vpop.permute.xlu0 %430
    %433 = vset.pattern.permute.xlu0 3
    %434 = vperm.xlu0 %433, %v66
    %v435 = vpop.permute.xlu0 %434
    %437 = vset.pattern.permute.xlu0 3
    %438 = vperm.xlu0 %437, %v67
    %v439 = vpop.permute.xlu0 %438
    %441 = vset.pattern.permute.xlu0 3
    %442 = vperm.xlu0 %441, %v68
    %v443 = vpop.permute.xlu0 %442
    %v445 = vperm.slane %v69, 3
    %v446 = vmul.f32 %v383, %v445
    %v447 = vmul.f32 %v387, %v445
    %v448 = vmul.f32 %v391, %v445
    %v449 = vmul.f32 %v395, %v445
    %v450 = vmul.f32 %v399, %v445
    %v451 = vmul.f32 %v403, %v445
    %v452 = vmul.f32 %v407, %v445
    %v453 = vmul.f32 %v411, %v445
    %v454 = vmul.f32 %v415, %v445
    %v455 = vmul.f32 %v419, %v445
    %v456 = vmul.f32 %v423, %v445
    %v457 = vmul.f32 %v427, %v445
    %v458 = vmul.f32 %v431, %v445
    %v459 = vmul.f32 %v435, %v445
    %v460 = vmul.f32 %v439, %v445
    %v461 = vmul.f32 %v443, %v445
    %v462 = vadd.f32 %v365, %v446
    %v463 = vadd.f32 %v366, %v447
    %v464 = vadd.f32 %v367, %v448
    %v465 = vadd.f32 %v368, %v449
    %v466 = vadd.f32 %v369, %v450
    %v467 = vadd.f32 %v370, %v451
    %v468 = vadd.f32 %v371, %v452
    %v469 = vadd.f32 %v372, %v453
    %v470 = vadd.f32 %v373, %v454
    %v471 = vadd.f32 %v374, %v455
    %v472 = vadd.f32 %v375, %v456
    %v473 = vadd.f32 %v376, %v457
    %v474 = vadd.f32 %v377, %v458
    %v475 = vadd.f32 %v378, %v459
    %v476 = vadd.f32 %v379, %v460
    %v477 = vadd.f32 %v380, %v461
    %v478 = vld [vmem:[%s6] sm:$0xff]
    %v479 = vld [vmem:[%s6 + $0x8] sm:$0xff]
    %v480 = vld [vmem:[%s6 + $0x10] sm:$0xff]
    %v481 = vld [vmem:[%s6 + $0x18] sm:$0xff]
    %v482 = vld [vmem:[%s6 + $0x20] sm:$0xff]
    %v483 = vld [vmem:[%s6 + $0x28] sm:$0xff]
    %v484 = vld [vmem:[%s7] sm:$0x1]
    %v486 = vperm.slane %v484, 0
    %vm488 = vcmask 392192
    %v490 = vsel %vm488, %v462, 0
    %v493 = vsel %vm488, %v463, 0
    %v496 = vsel %vm488, %v464, 0
    %v499 = vsel %vm488, %v465, 0
    %v502 = vsel %vm488, %v466, 0
    %v505 = vsel %vm488, %v467, 0
    %v508 = vsel %vm488, %v468, 0
    %v511 = vsel %vm488, %v469, 0
    %v514 = vsel %vm488, %v470, 0
    %v517 = vsel %vm488, %v471, 0
    %v520 = vsel %vm488, %v472, 0
    %v523 = vsel %vm488, %v473, 0
    %v526 = vsel %vm488, %v474, 0
    %v529 = vsel %vm488, %v475, 0
    %v532 = vsel %vm488, %v476, 0
    %v535 = vsel %vm488, %v477, 0
    %537 = vmatpush.msra.mxu0 0.0
    %538 = vmatpush.msra.mxu0 0.0
    %539 = vmatpush.msra.mxu0 0.0
    %540 = vmatpush.msra.mxu0 0.0
    %541 = vmatpush.msra.mxu0 0.0
    %542 = vmatpush.msra.mxu0 0.0
    %543 = vmatpush.msra.mxu0 0.0
    %544 = vmatpush.msra.mxu0 0.0
    %545 = vmatpush.msra.mxu0 0.0
    %546 = vmatpush.msra.mxu0 0.0
    %547 = vmatpush.msra.mxu0 %v483
    %548 = vmatpush.msra.mxu0 %v482
    %549 = vmatpush.msra.mxu0 %v481
    %550 = vmatpush.msra.mxu0 %v480
    %551 = vmatpush.msra.mxu0 %v479
    %552 = vmatpush.msra.mxu0 %v478
    %553 = vmatmul.f32.gmra.mxu0 %v490
    %v554 = vpop.f32.mrf.mxu0
    %v555 = vadd.f32 %v486, %v554
    %556 = vmatmul.f32.gmra.mxu0 %v493
    %v557 = vpop.f32.mrf.mxu0
    %v558 = vadd.f32 %v486, %v557
    %559 = vmatmul.f32.gmra.mxu0 %v496
    %v560 = vpop.f32.mrf.mxu0
    %v561 = vadd.f32 %v486, %v560
    %562 = vmatmul.f32.gmra.mxu0 %v499
    %v563 = vpop.f32.mrf.mxu0
    %v564 = vadd.f32 %v486, %v563
    %565 = vmatmul.f32.gmra.mxu0 %v502
    %v566 = vpop.f32.mrf.mxu0
    %v567 = vadd.f32 %v486, %v566
    %568 = vmatmul.f32.gmra.mxu0 %v505
    %v569 = vpop.f32.mrf.mxu0
    %v570 = vadd.f32 %v486, %v569
    %571 = vmatmul.f32.gmra.mxu0 %v508
    %v572 = vpop.f32.mrf.mxu0
    %v573 = vadd.f32 %v486, %v572
    %574 = vmatmul.f32.gmra.mxu0 %v511
    %v575 = vpop.f32.mrf.mxu0
    %v576 = vadd.f32 %v486, %v575
    %577 = vmatmul.f32.gmra.mxu0 %v514
    %v578 = vpop.f32.mrf.mxu0
    %v579 = vadd.f32 %v486, %v578
    %580 = vmatmul.f32.gmra.mxu0 %v517
    %v581 = vpop.f32.mrf.mxu0
    %v582 = vadd.f32 %v486, %v581
    %583 = vmatmul.f32.gmra.mxu0 %v520
    %v584 = vpop.f32.mrf.mxu0
    %v585 = vadd.f32 %v486, %v584
    %586 = vmatmul.f32.gmra.mxu0 %v523
    %v587 = vpop.f32.mrf.mxu0
    %v588 = vadd.f32 %v486, %v587
    %589 = vmatmul.f32.gmra.mxu0 %v526
    %v590 = vpop.f32.mrf.mxu0
    %v591 = vadd.f32 %v486, %v590
    %592 = vmatmul.f32.gmra.mxu0 %v529
    %v593 = vpop.f32.mrf.mxu0
    %v594 = vadd.f32 %v486, %v593
    %595 = vmatmul.f32.gmra.mxu0 %v532
    %v596 = vpop.f32.mrf.mxu0
    %v597 = vadd.f32 %v486, %v596
    %598 = vmatmul.f32.gmra.mxu0 %v535
    %v599 = vpop.f32.mrf.mxu0
    %v600 = vadd.f32 %v486, %v599
    %601 = vdwg.mxu0
    %v602 = vld [vmem:[%s8] sm:$0xff]
    %v603 = vld [vmem:[%s8 + $0x8] sm:$0xff]
    %v604 = vld [vmem:[%s8 + $0x10] sm:$0xff]
    %v605 = vld [vmem:[%s8 + $0x18] sm:$0xff]
    %v606 = vld [vmem:[%s8 + $0x20] sm:$0xff]
    %v607 = vld [vmem:[%s8 + $0x28] sm:$0xff]
    %v608 = vld [vmem:[%s8 + $0x30] sm:$0xff]
    %v609 = vld [vmem:[%s8 + $0x38] sm:$0xf]
    %v610 = vld [vmem:[%s3] sm:$0xff]
    %v611 = vld [vmem:[%s3 + $0x8] sm:$0xff]
    %v612 = vld [vmem:[%s3 + $0x10] sm:$0xff]
    %v613 = vld [vmem:[%s3 + $0x18] sm:$0xff]
    %v614 = vld [vmem:[%s3 + $0x20] sm:$0xff]
    %v615 = vld [vmem:[%s3 + $0x28] sm:$0xff]
    %v616 = vld [vmem:[%s3 + $0x30] sm:$0xff]
    %v617 = vld [vmem:[%s3 + $0x38] sm:$0xf]
    %v618 = vld [vmem:[%s4] sm:$0xff]
    %v619 = vld [vmem:[%s4 + $0x8] sm:$0xff]
    %v620 = vld [vmem:[%s4 + $0x10] sm:$0xff]
    %v621 = vld [vmem:[%s4 + $0x18] sm:$0xff]
    %v622 = vld [vmem:[%s4 + $0x20] sm:$0xff]
    %v623 = vld [vmem:[%s4 + $0x28] sm:$0xff]
    %v624 = vld [vmem:[%s5] sm:$0x1]
    %v626 = vperm.slane %v624, 0
    %v629 = vsel %vm488, %v610, 0
    %v632 = vsel %vm488, %v611, 0
    %v635 = vsel %vm488, %v612, 0
    %v638 = vsel %vm488, %v613, 0
    %v641 = vsel %vm488, %v614, 0
    %v644 = vsel %vm488, %v615, 0
    %v647 = vsel %vm488, %v616, 0
    %v650 = vsel %vm488, %v617, 0
    %652 = vmatpush.msra.mxu0 0.0
    %653 = vmatpush.msra.mxu0 0.0
    %654 = vmatpush.msra.mxu0 0.0
    %655 = vmatpush.msra.mxu0 0.0
    %656 = vmatpush.msra.mxu0 0.0
    %657 = vmatpush.msra.mxu0 0.0
    %658 = vmatpush.msra.mxu0 0.0
    %659 = vmatpush.msra.mxu0 0.0
    %660 = vmatpush.msra.mxu0 0.0
    %661 = vmatpush.msra.mxu0 0.0
    %662 = vmatpush.msra.mxu0 %v623
    %663 = vmatpush.msra.mxu0 %v622
    %664 = vmatpush.msra.mxu0 %v621
    %665 = vmatpush.msra.mxu0 %v620
    %666 = vmatpush.msra.mxu0 %v619
    %667 = vmatpush.msra.mxu0 %v618
    %668 = vmatmul.f32.gmra.mxu0 %v629
    %v669 = vpop.f32.mrf.mxu0
    %v670 = vadd.f32 %v626, %v669
    %671 = vmatmul.f32.gmra.mxu0 %v632
    %v672 = vpop.f32.mrf.mxu0
    %v673 = vadd.f32 %v626, %v672
    %674 = vmatmul.f32.gmra.mxu0 %v635
    %v675 = vpop.f32.mrf.mxu0
    %v676 = vadd.f32 %v626, %v675
    %677 = vmatmul.f32.gmra.mxu0 %v638
    %v678 = vpop.f32.mrf.mxu0
    %v679 = vadd.f32 %v626, %v678
    %680 = vmatmul.f32.gmra.mxu0 %v641
    %v681 = vpop.f32.mrf.mxu0
    %v682 = vadd.f32 %v626, %v681
    %683 = vmatmul.f32.gmra.mxu0 %v644
    %v684 = vpop.f32.mrf.mxu0
    %v685 = vadd.f32 %v626, %v684
    %686 = vmatmul.f32.gmra.mxu0 %v647
    %v687 = vpop.f32.mrf.mxu0
    %v688 = vadd.f32 %v626, %v687
    %689 = vmatmul.f32.gmra.mxu0 %v650
    %v690 = vpop.f32.mrf.mxu0
    %v691 = vadd.f32 %v626, %v690
    %692 = vdwg.mxu0
    %v693 = vmul.f32 %v670, %v602
    %v694 = vmul.f32 %v673, %v603
    %v695 = vmul.f32 %v676, %v604
    %v696 = vmul.f32 %v679, %v605
    %v697 = vmul.f32 %v682, %v606
    %v698 = vmul.f32 %v685, %v607
    %v699 = vmul.f32 %v688, %v608
    %v700 = vmul.f32 %v691, %v609
    %v701 = vld [vmem:[%s9] sm:$0x1]
    %v702 = vld [vmem:[%s10] sm:$0x1]
    %v703 = vld [vmem:[%s11] sm:$0xff]
    %v704 = vld [vmem:[%s11 + $0x8] sm:$0x3]
    %v705 = vld [vmem:[%s13] sm:$0xff]
    %v706 = vld [vmem:[%s13 + $0x8] sm:$0x3]
    %v707 = vsub.f32 %v703, %v705
    %v708 = vsub.f32 %v704, %v706
    %v709 = vld [vmem:[%s12] sm:$0xff]
    %v710 = vld [vmem:[%s12 + $0x8] sm:$0x3]
    %v711 = vld [vmem:[%s14] sm:$0xff]
    %v712 = vld [vmem:[%s14 + $0x8] sm:$0x3]
    %v713 = vsub.f32 %v709, %v711
    %v714 = vsub.f32 %v710, %v712
    %v715 = vlaneseq
    %v716 = vshrl.u32 %v715, 7
    %v717 = vadd.s32 %v716, 8
    %v718 = vlaneseq
    %v719 = vand.u32 %v718, 127
    %vm720 = vcmp.eq.s32.totalorder %v716, %v719
    %vm721 = vcmp.eq.s32.totalorder %v717, %v719
    %v722 = vsel %vm720, 1, 0
    %v723 = vsel %vm721, 1, 0
    %v724 = vcvt.s32.f32 %v722
    %v725 = vcvt.s32.f32 %v723
    %v726 = vsel %vm488, %v462, 0.0
    %v727 = vsel %vm488, %v463, 0.0
    %v728 = vadd.f32 %v726, %v727
    %v729 = vsel %vm488, %v464, 0.0
    %v730 = vadd.f32 %v728, %v729
    %v731 = vsel %vm488, %v465, 0.0
    %v732 = vadd.f32 %v730, %v731
    %v733 = vsel %vm488, %v466, 0.0
    %v734 = vadd.f32 %v732, %v733
    %v735 = vsel %vm488, %v467, 0.0
    %v736 = vadd.f32 %v734, %v735
    %v737 = vsel %vm488, %v468, 0.0
    %v738 = vadd.f32 %v736, %v737
    %v739 = vsel %vm488, %v469, 0.0
    %v740 = vadd.f32 %v738, %v739
    %v741 = vrot.slane %v740, 4
    %v742 = vadd.f32 %v740, %v741
    %v743 = vrot.slane %v742, 2
    %v744 = vadd.f32 %v742, %v743
    %v745 = vrot.slane %v744, 1
    %v746 = vadd.f32 %v744, %v745
    %v747 = vrcp.pop 64.0
    %v748 = vmul.f32 64.0, %v747
    %v749 = vsub.f32 1.0, %v748
    %v750 = vmul.f32 %v747, %v749
    %v751 = vadd.f32 %v747, %v750
    %vm752 = vweird.f32 %v747
    %v753 = vsel %vm752, %v747, %v751
    %v754 = vmul.f32 %v746, %v753
    %v756 = vsel %vm488, %v693, 0
    %v759 = vsel %vm488, %v694, 0
    %v762 = vsel %vm488, %v695, 0
    %v765 = vsel %vm488, %v696, 0
    %v768 = vsel %vm488, %v697, 0
    %v771 = vsel %vm488, %v698, 0
    %v774 = vsel %vm488, %v699, 0
    %v777 = vsel %vm488, %v700, 0
    %v780 = vsel %vm488, %v555, 0
    %v783 = vsel %vm488, %v558, 0
    %v786 = vsel %vm488, %v561, 0
    %v789 = vsel %vm488, %v564, 0
    %v792 = vsel %vm488, %v567, 0
    %v795 = vsel %vm488, %v570, 0
    %v798 = vsel %vm488, %v573, 0
    %v801 = vsel %vm488, %v576, 0
    %803 = vmatpush.xpose.msra.mxu0 0.0
    %804 = vmatpush.xpose.msra.mxu0 0.0
    %805 = vmatpush.xpose.msra.mxu0 0.0
    %806 = vmatpush.xpose.msra.mxu0 0.0
    %807 = vmatpush.xpose.msra.mxu0 0.0
    %808 = vmatpush.xpose.msra.mxu0 0.0
    %809 = vmatpush.xpose.msra.mxu0 0.0
    %810 = vmatpush.xpose.msra.mxu0 0.0
    %811 = vmatpush.xpose.msra.mxu0 %v801
    %812 = vmatpush.xpose.msra.mxu0 %v798
    %813 = vmatpush.xpose.msra.mxu0 %v795
    %814 = vmatpush.xpose.msra.mxu0 %v792
    %815 = vmatpush.xpose.msra.mxu0 %v789
    %816 = vmatpush.xpose.msra.mxu0 %v786
    %817 = vmatpush.xpose.msra.mxu0 %v783
    %818 = vmatpush.xpose.msra.mxu0 %v780
    %819 = vmatmul.f32.gmra.mxu0 %v756
    %v820 = vpop.f32.mrf.mxu0
    %v821 = vadd.f32 0.0, %v820
    %822 = vmatmul.f32.gmra.mxu0 %v759
    %v823 = vpop.f32.mrf.mxu0
    %v824 = vadd.f32 0.0, %v823
    %825 = vmatmul.f32.gmra.mxu0 %v762
    %v826 = vpop.f32.mrf.mxu0
    %v827 = vadd.f32 0.0, %v826
    %828 = vmatmul.f32.gmra.mxu0 %v765
    %v829 = vpop.f32.mrf.mxu0
    %v830 = vadd.f32 0.0, %v829
    %831 = vmatmul.f32.gmra.mxu0 %v768
    %v832 = vpop.f32.mrf.mxu0
    %v833 = vadd.f32 0.0, %v832
    %834 = vmatmul.f32.gmra.mxu0 %v771
    %v835 = vpop.f32.mrf.mxu0
    %v836 = vadd.f32 0.0, %v835
    %837 = vmatmul.f32.gmra.mxu0 %v774
    %v838 = vpop.f32.mrf.mxu0
    %v839 = vadd.f32 0.0, %v838
    %840 = vmatmul.f32.gmra.mxu0 %v777
    %v841 = vpop.f32.mrf.mxu0
    %v842 = vadd.f32 0.0, %v841
    %843 = vdwg.mxu0
    %v844 = vmul.f32 %v821, 0.35355338
    %v845 = vmul.f32 %v824, 0.35355338
    %v846 = vmul.f32 %v827, 0.35355338
    %v847 = vmul.f32 %v830, 0.35355338
    %v848 = vmul.f32 %v833, 0.35355338
    %v849 = vmul.f32 %v836, 0.35355338
    %v850 = vmul.f32 %v839, 0.35355338
    %v851 = vmul.f32 %v842, 0.35355338
    %vm852 = vcmask 523264
    %v853 = vsel %vm852, %v844, -inf
    %854 = vmax.xlane.f32.xlu0 %v853
    %v855 = vpop.xlane.xlu0 %854
    %v856 = vsel %vm852, %v845, -inf
    %857 = vmax.xlane.f32.xlu0 %v856
    %v858 = vpop.xlane.xlu0 %857
    %v859 = vsel %vm852, %v846, -inf
    %860 = vmax.xlane.f32.xlu0 %v859
    %v861 = vpop.xlane.xlu0 %860
    %v862 = vsel %vm852, %v847, -inf
    %863 = vmax.xlane.f32.xlu0 %v862
    %v864 = vpop.xlane.xlu0 %863
    %v865 = vsel %vm852, %v848, -inf
    %866 = vmax.xlane.f32.xlu0 %v865
    %v867 = vpop.xlane.xlu0 %866
    %v868 = vsel %vm852, %v849, -inf
    %869 = vmax.xlane.f32.xlu0 %v868
    %v870 = vpop.xlane.xlu0 %869
    %v871 = vsel %vm852, %v850, -inf
    %872 = vmax.xlane.f32.xlu0 %v871
    %v873 = vpop.xlane.xlu0 %872
    %vm874 = vcmask 519168
    %v875 = vsel %vm874, %v851, -inf
    %876 = vmax.xlane.f32.xlu0 %v875
    %v877 = vpop.xlane.xlu0 %876
    %v878 = vsub.f32 %v844, %v855
    %v879 = vsub.f32 %v845, %v858
    %v880 = vsub.f32 %v846, %v861
    %v881 = vsub.f32 %v847, %v864
    %v882 = vsub.f32 %v848, %v867
    %v883 = vsub.f32 %v849, %v870
    %v884 = vsub.f32 %v850, %v873
    %v885 = vsub.f32 %v851, %v877
    %v886 = vmul.f32 %v878, 1.442695
    %v887 = vpow.pop %v886
    %v888 = vmul.f32 %v879, 1.442695
    %v889 = vpow.pop %v888
    %v890 = vmul.f32 %v880, 1.442695
    %v891 = vpow.pop %v890
    %v892 = vmul.f32 %v881, 1.442695
    %v893 = vpow.pop %v892
    %v894 = vmul.f32 %v882, 1.442695
    %v895 = vpow.pop %v894
    %v896 = vmul.f32 %v883, 1.442695
    %v897 = vpow.pop %v896
    %v898 = vmul.f32 %v884, 1.442695
    %v899 = vpow.pop %v898
    %v900 = vmul.f32 %v885, 1.442695
    %v901 = vpow.pop %v900
    %v902 = vsel %vm852, %v887, 0.0
    %903 = vadd.xlane.f32.xlu0 %v902
    %v904 = vpop.xlane.xlu0 %903
    %v905 = vsel %vm852, %v889, 0.0
    %906 = vadd.xlane.f32.xlu0 %v905
    %v907 = vpop.xlane.xlu0 %906
    %v908 = vsel %vm852, %v891, 0.0
    %909 = vadd.xlane.f32.xlu0 %v908
    %v910 = vpop.xlane.xlu0 %909
    %v911 = vsel %vm852, %v893, 0.0
    %912 = vadd.xlane.f32.xlu0 %v911
    %v913 = vpop.xlane.xlu0 %912
    %v914 = vsel %vm852, %v895, 0.0
    %915 = vadd.xlane.f32.xlu0 %v914
    %v916 = vpop.xlane.xlu0 %915
    %v917 = vsel %vm852, %v897, 0.0
    %918 = vadd.xlane.f32.xlu0 %v917
    %v919 = vpop.xlane.xlu0 %918
    %v920 = vsel %vm852, %v899, 0.0
    %921 = vadd.xlane.f32.xlu0 %v920
    %v922 = vpop.xlane.xlu0 %921
    %v923 = vsel %vm874, %v901, 0.0
    %924 = vadd.xlane.f32.xlu0 %v923
    %v925 = vpop.xlane.xlu0 %924
    %v926 = vrcp.pop %v904
    %v927 = vrcp.pop %v907
    %v928 = vrcp.pop %v910
    %v929 = vrcp.pop %v913
    %v930 = vrcp.pop %v916
    %v931 = vrcp.pop %v919
    %v932 = vrcp.pop %v922
    %v933 = vrcp.pop %v925
    %v934 = vmul.f32 %v887, %v926
    %v935 = vmul.f32 %v889, %v927
    %v936 = vmul.f32 %v891, %v928
    %v937 = vmul.f32 %v893, %v929
    %v938 = vmul.f32 %v895, %v930
    %v939 = vmul.f32 %v897, %v931
    %v940 = vmul.f32 %v899, %v932
    %v941 = vmul.f32 %v901, %v933
    %v943 = vsel %vm852, %v934, 0
    %v946 = vsel %vm852, %v935, 0
    %v949 = vsel %vm852, %v936, 0
    %v952 = vsel %vm852, %v937, 0
    %v955 = vsel %vm852, %v938, 0
    %v958 = vsel %vm852, %v939, 0
    %v961 = vsel %vm852, %v940, 0
    %v964 = vsel %vm852, %v941, 0
    %966 = vmatpush.msra.mxu0 0.0
    %967 = vmatpush.msra.mxu0 0.0
    %968 = vmatpush.msra.mxu0 0.0
    %969 = vmatpush.msra.mxu0 0.0
    %970 = vmatpush.msra.mxu0 0.0
    %971 = vmatpush.msra.mxu0 0.0
    %972 = vmatpush.msra.mxu0 0.0
    %973 = vmatpush.msra.mxu0 0.0
    %974 = vmatpush.msra.mxu0 %v469
    %975 = vmatpush.msra.mxu0 %v468
    %976 = vmatpush.msra.mxu0 %v467
    %977 = vmatpush.msra.mxu0 %v466
    %978 = vmatpush.msra.mxu0 %v465
    %979 = vmatpush.msra.mxu0 %v464
    %980 = vmatpush.msra.mxu0 %v463
    %981 = vmatpush.msra.mxu0 %v462
    %982 = vmatmul.f32.gmra.mxu0 %v943
    %v983 = vpop.f32.mrf.mxu0
    %v984 = vadd.f32 0.0, %v983
    %985 = vmatmul.f32.gmra.mxu0 %v946
    %v986 = vpop.f32.mrf.mxu0
    %v987 = vadd.f32 0.0, %v986
    %988 = vmatmul.f32.gmra.mxu0 %v949
    %v989 = vpop.f32.mrf.mxu0
    %v990 = vadd.f32 0.0, %v989
    %991 = vmatmul.f32.gmra.mxu0 %v952
    %v992 = vpop.f32.mrf.mxu0
    %v993 = vadd.f32 0.0, %v992
    %994 = vmatmul.f32.gmra.mxu0 %v955
    %v995 = vpop.f32.mrf.mxu0
    %v996 = vadd.f32 0.0, %v995
    %997 = vmatmul.f32.gmra.mxu0 %v958
    %v998 = vpop.f32.mrf.mxu0
    %v999 = vadd.f32 0.0, %v998
    %1000 = vmatmul.f32.gmra.mxu0 %v961
    %v1001 = vpop.f32.mrf.mxu0
    %v1002 = vadd.f32 0.0, %v1001
    %1003 = vmatmul.f32.gmra.mxu0 %v964
    %v1004 = vpop.f32.mrf.mxu0
    %v1005 = vadd.f32 0.0, %v1004
    %1006 = vdwg.mxu0
    %v1007 = vmul.f32 %v984, %v602
    %v1008 = vmul.f32 %v987, %v603
    %v1009 = vmul.f32 %v990, %v604
    %v1010 = vmul.f32 %v993, %v605
    %v1011 = vmul.f32 %v996, %v606
    %v1012 = vmul.f32 %v999, %v607
    %v1013 = vmul.f32 %v1002, %v608
    %v1014 = vmul.f32 %v1005, %v609
    %vm1017 = vcmask 1045504
    %v1018 = vrot.slane %v1008, 2
    %v1019 = vrot.slane %v1009, 2
    %v1020 = vsel %vm1017, %v1018, %v1019
    %v1023 = vadd.f32 %v1007, %v1020
    %v1024 = vadd.f32 %v1008, %v1019
    %vm1026 = vcmask 1043456
    %v1027 = vrot.slane %v1009, 4
    %v1028 = vrot.slane %v1010, 4
    %v1029 = vsel %vm1026, %v1027, %v1028
    %v1032 = vadd.f32 %v1023, %v1029
    %v1033 = vadd.f32 %v1024, %v1028
    %vm1035 = vcmask 1041408
    %v1036 = vrot.slane %v1010, 6
    %v1037 = vrot.slane %v1011, 6
    %v1038 = vsel %vm1035, %v1036, %v1037
    %v1041 = vadd.f32 %v1032, %v1038
    %v1042 = vadd.f32 %v1033, %v1037
    %v1043 = vadd.f32 %v1041, %v1012
    %v1044 = vadd.f32 %v1042, %v1013
    %v1047 = vrot.slane %v1013, 2
    %v1048 = vrot.slane %v1014, 2
    %v1049 = vsel %vm1017, %v1047, %v1048
    %v1052 = vadd.f32 %v1043, %v1049
    %v1053 = vadd.f32 %v1044, %v1048
    %v1054 = vadd.f32 %v754, %v1052
    %v1055 = vadd.f32 %v754, %v1053
    %v1056 = vsel %vm488, %v1054, 0.0
    %1057 = vadd.xlane.f32.xlu0 %v1056
    %v1058 = vpop.xlane.xlu0 %1057
    %vm1059 = vcmask 386048
    %v1060 = vsel %vm1059, %v1055, 0.0
    %1061 = vadd.xlane.f32.xlu0 %v1060
    %v1062 = vpop.xlane.xlu0 %1061
    %v1063 = vrcp.pop 48.0
    %v1064 = vmul.f32 48.0, %v1063
    %v1065 = vsub.f32 1.0, %v1064
    %v1066 = vmul.f32 %v1063, %v1065
    %v1067 = vadd.f32 %v1063, %v1066
    %vm1068 = vweird.f32 %v1063
    %v1069 = vsel %vm1068, %v1063, %v1067
    %v1070 = vmul.f32 %v1058, %v1069
    %v1071 = vmul.f32 %v1062, %v1069
    %v1072 = vsub.f32 %v1054, %v1070
    %v1073 = vsub.f32 %v1055, %v1071
    %v1074 = vmul.f32 %v1072, %v1072
    %v1075 = vmul.f32 %v1073, %v1073
    %v1076 = vsel %vm488, %v1074, 0.0
    %1077 = vadd.xlane.f32.xlu0 %v1076
    %v1078 = vpop.xlane.xlu0 %1077
    %v1079 = vsel %vm1059, %v1075, 0.0
    %1080 = vadd.xlane.f32.xlu0 %v1079
    %v1081 = vpop.xlane.xlu0 %1080
    %v1082 = vmul.f32 %v1078, %v1069
    %v1083 = vmul.f32 %v1081, %v1069
    %v1084 = vadd.f32 %v1082, 1e-06
    %v1085 = vadd.f32 %v1083, 1e-06
    %v1086 = vrsqrt.pop %v1084
    %v1087 = vmul.f32 %v1086, %v1084
    %v1088 = vmul.f32 %v1087, %v1086
    %v1089 = vmul.f32 0.5, %v1088
    %v1090 = vsub.f32 1.5, %v1089
    %v1091 = vmul.f32 %v1086, %v1090
    %vm1092 = vweird.f32 %v1084
    %vm1093 = vweird.f32 %v1086
    %vm1094 = vmor %vm1092, %vm1093
    %v1095 = vsel %vm1094, %v1086, %v1091
    %v1096 = vrsqrt.pop %v1085
    %v1097 = vmul.f32 %v1096, %v1085
    %v1098 = vmul.f32 %v1097, %v1096
    %v1099 = vmul.f32 0.5, %v1098
    %v1100 = vsub.f32 1.5, %v1099
    %v1101 = vmul.f32 %v1096, %v1100
    %vm1102 = vweird.f32 %v1085
    %vm1103 = vweird.f32 %v1096
    %vm1104 = vmor %vm1102, %vm1103
    %v1105 = vsel %vm1104, %v1096, %v1101
    %v1106 = vmul.f32 %v1072, %v1095
    %v1107 = vmul.f32 %v1073, %v1105
    %v1109 = vperm.slane %v701, 0
    %v1111 = vmul.f32 %v1106, %v1109
    %v1112 = vmul.f32 %v1107, %v1109
    %v1114 = vperm.slane %v702, 0
    %v1116 = vadd.f32 %v1111, %v1114
    %v1117 = vadd.f32 %v1112, %v1114
    %1118 = vst.msk [vmem:[%s16] sm:$0xff] %vm488, %v1116
    %1119 = vst.msk [vmem:[%s16 + $0x8] sm:$0x3] %vm1059, %v1117
    %v1120 = vmul.f32 %v1116, %v707
    %v1121 = vmul.f32 %v1117, %v708
    %v1122 = vsel %vm488, %v1120, 0.0
    %1123 = vadd.xlane.f32.xlu0 %v1122
    %v1124 = vpop.xlane.xlu0 %1123
    %v1125 = vsel %vm1059, %v1121, 0.0
    %1126 = vadd.xlane.f32.xlu0 %v1125
    %v1127 = vpop.xlane.xlu0 %1126
    %v1128 = vadd.f32 %v1124, %v713
    %v1129 = vadd.f32 %v1127, %v714
    %1131 = vset.pattern.permute.xlu0 0
    %1132 = vperm.xlu0 %1131, %v1128
    %v1133 = vpop.permute.xlu0 %1132
    %1136 = vset.pattern.permute.xlu0 0
    %1137 = vperm.xlu0 %1136, %v1129
    %v1138 = vpop.permute.xlu0 %1137
    %v1140 = vmul.f32 %v1133, %v724
    %v1141 = vmul.f32 %v1138, %v725
    %vm1142 = vcmask 80896
    %v1143 = vsel %vm1142, %v1140, 0.0
    %vm1144 = vcmask 74752
    %v1145 = vsel %vm1144, %v1141, 0.0
    %v1146 = vadd.f32 %v1143, %v1145
    %v1147 = vrot.slane %v1146, 4
    %v1148 = vadd.f32 %v1146, %v1147
    %v1149 = vrot.slane %v1148, 2
    %v1150 = vadd.f32 %v1148, %v1149
    %v1151 = vrot.slane %v1150, 1
    %v1152 = vadd.f32 %v1150, %v1151
    %vm1153 = vcmask 73728
    %1154 = vst.msk [vmem:[#allocation2] sm:$0x1] %vm1153, %v1152
    %v1155 = vsel %vm488, %v470, 0.0
    %v1156 = vsel %vm488, %v471, 0.0
    %v1157 = vadd.f32 %v1155, %v1156
    %v1158 = vsel %vm488, %v472, 0.0
    %v1159 = vadd.f32 %v1157, %v1158
    %v1160 = vsel %vm488, %v473, 0.0
    %v1161 = vadd.f32 %v1159, %v1160
    %v1162 = vsel %vm488, %v474, 0.0
    %v1163 = vadd.f32 %v1161, %v1162
    %v1164 = vsel %vm488, %v475, 0.0
    %v1165 = vadd.f32 %v1163, %v1164
    %v1166 = vsel %vm488, %v476, 0.0
    %v1167 = vadd.f32 %v1165, %v1166
    %v1168 = vsel %vm488, %v477, 0.0
    %v1169 = vadd.f32 %v1167, %v1168
    %v1170 = vrot.slane %v1169, 4
    %v1171 = vadd.f32 %v1169, %v1170
    %v1172 = vrot.slane %v1171, 2
    %v1173 = vadd.f32 %v1171, %v1172
    %v1174 = vrot.slane %v1173, 1
    %v1175 = vadd.f32 %v1173, %v1174
    %v1176 = vmul.f32 %v1175, %v753
    %v1178 = vsel %vm488, %v579, 0
    %v1181 = vsel %vm488, %v582, 0
    %v1184 = vsel %vm488, %v585, 0
    %v1187 = vsel %vm488, %v588, 0
    %v1190 = vsel %vm488, %v591, 0
    %v1193 = vsel %vm488, %v594, 0
    %v1196 = vsel %vm488, %v597, 0
    %v1199 = vsel %vm488, %v600, 0
    %1201 = vmatpush.xpose.msra.mxu0 0.0
    %1202 = vmatpush.xpose.msra.mxu0 0.0
    %1203 = vmatpush.xpose.msra.mxu0 0.0
    %1204 = vmatpush.xpose.msra.mxu0 0.0
    %1205 = vmatpush.xpose.msra.mxu0 0.0
    %1206 = vmatpush.xpose.msra.mxu0 0.0
    %1207 = vmatpush.xpose.msra.mxu0 0.0
    %1208 = vmatpush.xpose.msra.mxu0 0.0
    %1209 = vmatpush.xpose.msra.mxu0 %v1199
    %1210 = vmatpush.xpose.msra.mxu0 %v1196
    %1211 = vmatpush.xpose.msra.mxu0 %v1193
    %1212 = vmatpush.xpose.msra.mxu0 %v1190
    %1213 = vmatpush.xpose.msra.mxu0 %v1187
    %1214 = vmatpush.xpose.msra.mxu0 %v1184
    %1215 = vmatpush.xpose.msra.mxu0 %v1181
    %1216 = vmatpush.xpose.msra.mxu0 %v1178
    %1217 = vmatmul.f32.gmra.mxu0 %v756
    %v1218 = vpop.f32.mrf.mxu0
    %v1219 = vadd.f32 0.0, %v1218
    %1220 = vmatmul.f32.gmra.mxu0 %v759
    %v1221 = vpop.f32.mrf.mxu0
    %v1222 = vadd.f32 0.0, %v1221
    %1223 = vmatmul.f32.gmra.mxu0 %v762
    %v1224 = vpop.f32.mrf.mxu0
    %v1225 = vadd.f32 0.0, %v1224
    %1226 = vmatmul.f32.gmra.mxu0 %v765
    %v1227 = vpop.f32.mrf.mxu0
    %v1228 = vadd.f32 0.0, %v1227
    %1229 = vmatmul.f32.gmra.mxu0 %v768
    %v1230 = vpop.f32.mrf.mxu0
    %v1231 = vadd.f32 0.0, %v1230
    %1232 = vmatmul.f32.gmra.mxu0 %v771
    %v1233 = vpop.f32.mrf.mxu0
    %v1234 = vadd.f32 0.0, %v1233
    %1235 = vmatmul.f32.gmra.mxu0 %v774
    %v1236 = vpop.f32.mrf.mxu0
    %v1237 = vadd.f32 0.0, %v1236
    %1238 = vmatmul.f32.gmra.mxu0 %v777
    %v1239 = vpop.f32.mrf.mxu0
    %v1240 = vadd.f32 0.0, %v1239
    %1241 = vdwg.mxu0
    %v1242 = vmul.f32 %v1219, 0.35355338
    %v1243 = vmul.f32 %v1222, 0.35355338
    %v1244 = vmul.f32 %v1225, 0.35355338
    %v1245 = vmul.f32 %v1228, 0.35355338
    %v1246 = vmul.f32 %v1231, 0.35355338
    %v1247 = vmul.f32 %v1234, 0.35355338
    %v1248 = vmul.f32 %v1237, 0.35355338
    %v1249 = vmul.f32 %v1240, 0.35355338
    %v1250 = vsel %vm852, %v1242, -inf
    %1251 = vmax.xlane.f32.xlu0 %v1250
    %v1252 = vpop.xlane.xlu0 %1251
    %v1253 = vsel %vm852, %v1243, -inf
    %1254 = vmax.xlane.f32.xlu0 %v1253
    %v1255 = vpop.xlane.xlu0 %1254
    %v1256 = vsel %vm852, %v1244, -inf
    %1257 = vmax.xlane.f32.xlu0 %v1256
    %v1258 = vpop.xlane.xlu0 %1257
    %v1259 = vsel %vm852, %v1245, -inf
    %1260 = vmax.xlane.f32.xlu0 %v1259
    %v1261 = vpop.xlane.xlu0 %1260
    %v1262 = vsel %vm852, %v1246, -inf
    %1263 = vmax.xlane.f32.xlu0 %v1262
    %v1264 = vpop.xlane.xlu0 %1263
    %v1265 = vsel %vm852, %v1247, -inf
    %1266 = vmax.xlane.f32.xlu0 %v1265
    %v1267 = vpop.xlane.xlu0 %1266
    %v1268 = vsel %vm852, %v1248, -inf
    %1269 = vmax.xlane.f32.xlu0 %v1268
    %v1270 = vpop.xlane.xlu0 %1269
    %v1271 = vsel %vm874, %v1249, -inf
    %1272 = vmax.xlane.f32.xlu0 %v1271
    %v1273 = vpop.xlane.xlu0 %1272
    %v1274 = vsub.f32 %v1242, %v1252
    %v1275 = vsub.f32 %v1243, %v1255
    %v1276 = vsub.f32 %v1244, %v1258
    %v1277 = vsub.f32 %v1245, %v1261
    %v1278 = vsub.f32 %v1246, %v1264
    %v1279 = vsub.f32 %v1247, %v1267
    %v1280 = vsub.f32 %v1248, %v1270
    %v1281 = vsub.f32 %v1249, %v1273
    %v1282 = vmul.f32 %v1274, 1.442695
    %v1283 = vpow.pop %v1282
    %v1284 = vmul.f32 %v1275, 1.442695
    %v1285 = vpow.pop %v1284
    %v1286 = vmul.f32 %v1276, 1.442695
    %v1287 = vpow.pop %v1286
    %v1288 = vmul.f32 %v1277, 1.442695
    %v1289 = vpow.pop %v1288
    %v1290 = vmul.f32 %v1278, 1.442695
    %v1291 = vpow.pop %v1290
    %v1292 = vmul.f32 %v1279, 1.442695
    %v1293 = vpow.pop %v1292
    %v1294 = vmul.f32 %v1280, 1.442695
    %v1295 = vpow.pop %v1294
    %v1296 = vmul.f32 %v1281, 1.442695
    %v1297 = vpow.pop %v1296
    %v1298 = vsel %vm852, %v1283, 0.0
    %1299 = vadd.xlane.f32.xlu0 %v1298
    %v1300 = vpop.xlane.xlu0 %1299
    %v1301 = vsel %vm852, %v1285, 0.0
    %1302 = vadd.xlane.f32.xlu0 %v1301
    %v1303 = vpop.xlane.xlu0 %1302
    %v1304 = vsel %vm852, %v1287, 0.0
    %1305 = vadd.xlane.f32.xlu0 %v1304
    %v1306 = vpop.xlane.xlu0 %1305
    %v1307 = vsel %vm852, %v1289, 0.0
    %1308 = vadd.xlane.f32.xlu0 %v1307
    %v1309 = vpop.xlane.xlu0 %1308
    %v1310 = vsel %vm852, %v1291, 0.0
    %1311 = vadd.xlane.f32.xlu0 %v1310
    %v1312 = vpop.xlane.xlu0 %1311
    %v1313 = vsel %vm852, %v1293, 0.0
    %1314 = vadd.xlane.f32.xlu0 %v1313
    %v1315 = vpop.xlane.xlu0 %1314
    %v1316 = vsel %vm852, %v1295, 0.0
    %1317 = vadd.xlane.f32.xlu0 %v1316
    %v1318 = vpop.xlane.xlu0 %1317
    %v1319 = vsel %vm874, %v1297, 0.0
    %1320 = vadd.xlane.f32.xlu0 %v1319
    %v1321 = vpop.xlane.xlu0 %1320
    %v1322 = vrcp.pop %v1300
    %v1323 = vrcp.pop %v1303
    %v1324 = vrcp.pop %v1306
    %v1325 = vrcp.pop %v1309
    %v1326 = vrcp.pop %v1312
    %v1327 = vrcp.pop %v1315
    %v1328 = vrcp.pop %v1318
    %v1329 = vrcp.pop %v1321
    %v1330 = vmul.f32 %v1283, %v1322
    %v1331 = vmul.f32 %v1285, %v1323
    %v1332 = vmul.f32 %v1287, %v1324
    %v1333 = vmul.f32 %v1289, %v1325
    %v1334 = vmul.f32 %v1291, %v1326
    %v1335 = vmul.f32 %v1293, %v1327
    %v1336 = vmul.f32 %v1295, %v1328
    %v1337 = vmul.f32 %v1297, %v1329
    %v1339 = vsel %vm852, %v1330, 0
    %v1342 = vsel %vm852, %v1331, 0
    %v1345 = vsel %vm852, %v1332, 0
    %v1348 = vsel %vm852, %v1333, 0
    %v1351 = vsel %vm852, %v1334, 0
    %v1354 = vsel %vm852, %v1335, 0
    %v1357 = vsel %vm852, %v1336, 0
    %v1360 = vsel %vm852, %v1337, 0
    %1362 = vmatpush.msra.mxu0 0.0
    %1363 = vmatpush.msra.mxu0 0.0
    %1364 = vmatpush.msra.mxu0 0.0
    %1365 = vmatpush.msra.mxu0 0.0
    %1366 = vmatpush.msra.mxu0 0.0
    %1367 = vmatpush.msra.mxu0 0.0
    %1368 = vmatpush.msra.mxu0 0.0
    %1369 = vmatpush.msra.mxu0 0.0
    %1370 = vmatpush.msra.mxu0 %v477
    %1371 = vmatpush.msra.mxu0 %v476
    %1372 = vmatpush.msra.mxu0 %v475
    %1373 = vmatpush.msra.mxu0 %v474
    %1374 = vmatpush.msra.mxu0 %v473
    %1375 = vmatpush.msra.mxu0 %v472
    %1376 = vmatpush.msra.mxu0 %v471
    %1377 = vmatpush.msra.mxu0 %v470
    %1378 = vmatmul.f32.gmra.mxu0 %v1339
    %v1379 = vpop.f32.mrf.mxu0
    %v1380 = vadd.f32 0.0, %v1379
    %1381 = vmatmul.f32.gmra.mxu0 %v1342
    %v1382 = vpop.f32.mrf.mxu0
    %v1383 = vadd.f32 0.0, %v1382
    %1384 = vmatmul.f32.gmra.mxu0 %v1345
    %v1385 = vpop.f32.mrf.mxu0
    %v1386 = vadd.f32 0.0, %v1385
    %1387 = vmatmul.f32.gmra.mxu0 %v1348
    %v1388 = vpop.f32.mrf.mxu0
    %v1389 = vadd.f32 0.0, %v1388
    %1390 = vmatmul.f32.gmra.mxu0 %v1351
    %v1391 = vpop.f32.mrf.mxu0
    %v1392 = vadd.f32 0.0, %v1391
    %1393 = vmatmul.f32.gmra.mxu0 %v1354
    %v1394 = vpop.f32.mrf.mxu0
    %v1395 = vadd.f32 0.0, %v1394
    %1396 = vmatmul.f32.gmra.mxu0 %v1357
    %v1397 = vpop.f32.mrf.mxu0
    %v1398 = vadd.f32 0.0, %v1397
    %1399 = vmatmul.f32.gmra.mxu0 %v1360
    %v1400 = vpop.f32.mrf.mxu0
    %v1401 = vadd.f32 0.0, %v1400
    %1402 = vdwg.mxu0
    %v1403 = vmul.f32 %v1380, %v602
    %v1404 = vmul.f32 %v1383, %v603
    %v1405 = vmul.f32 %v1386, %v604
    %v1406 = vmul.f32 %v1389, %v605
    %v1407 = vmul.f32 %v1392, %v606
    %v1408 = vmul.f32 %v1395, %v607
    %v1409 = vmul.f32 %v1398, %v608
    %v1410 = vmul.f32 %v1401, %v609
    %v1413 = vrot.slane %v1404, 2
    %v1414 = vrot.slane %v1405, 2
    %v1415 = vsel %vm1017, %v1413, %v1414
    %v1418 = vadd.f32 %v1403, %v1415
    %v1419 = vadd.f32 %v1404, %v1414
    %v1421 = vrot.slane %v1405, 4
    %v1422 = vrot.slane %v1406, 4
    %v1423 = vsel %vm1026, %v1421, %v1422
    %v1426 = vadd.f32 %v1418, %v1423
    %v1427 = vadd.f32 %v1419, %v1422
    %v1429 = vrot.slane %v1406, 6
    %v1430 = vrot.slane %v1407, 6
    %v1431 = vsel %vm1035, %v1429, %v1430
    %v1434 = vadd.f32 %v1426, %v1431
    %v1435 = vadd.f32 %v1427, %v1430
    %v1436 = vadd.f32 %v1434, %v1408
    %v1437 = vadd.f32 %v1435, %v1409
    %v1440 = vrot.slane %v1409, 2
    %v1441 = vrot.slane %v1410, 2
    %v1442 = vsel %vm1017, %v1440, %v1441
    %v1445 = vadd.f32 %v1436, %v1442
    %v1446 = vadd.f32 %v1437, %v1441
    %v1447 = vadd.f32 %v1176, %v1445
    %v1448 = vadd.f32 %v1176, %v1446
    %v1449 = vsel %vm488, %v1447, 0.0
    %1450 = vadd.xlane.f32.xlu0 %v1449
    %v1451 = vpop.xlane.xlu0 %1450
    %v1452 = vsel %vm1059, %v1448, 0.0
    %1453 = vadd.xlane.f32.xlu0 %v1452
    %v1454 = vpop.xlane.xlu0 %1453
    %v1455 = vmul.f32 %v1451, %v1069
    %v1456 = vmul.f32 %v1454, %v1069
    %v1457 = vsub.f32 %v1447, %v1455
    %v1458 = vsub.f32 %v1448, %v1456
    %v1459 = vmul.f32 %v1457, %v1457
    %v1460 = vmul.f32 %v1458, %v1458
    %v1461 = vsel %vm488, %v1459, 0.0
    %1462 = vadd.xlane.f32.xlu0 %v1461
    %v1463 = vpop.xlane.xlu0 %1462
    %v1464 = vsel %vm1059, %v1460, 0.0
    %1465 = vadd.xlane.f32.xlu0 %v1464
    %v1466 = vpop.xlane.xlu0 %1465
    %v1467 = vmul.f32 %v1463, %v1069
    %v1468 = vmul.f32 %v1466, %v1069
    %v1469 = vadd.f32 %v1467, 1e-06
    %v1470 = vadd.f32 %v1468, 1e-06
    %v1471 = vrsqrt.pop %v1469
    %v1472 = vmul.f32 %v1471, %v1469
    %v1473 = vmul.f32 %v1472, %v1471
    %v1474 = vmul.f32 0.5, %v1473
    %v1475 = vsub.f32 1.5, %v1474
    %v1476 = vmul.f32 %v1471, %v1475
    %vm1477 = vweird.f32 %v1469
    %vm1478 = vweird.f32 %v1471
    %vm1479 = vmor %vm1477, %vm1478
    %v1480 = vsel %vm1479, %v1471, %v1476
    %v1481 = vrsqrt.pop %v1470
    %v1482 = vmul.f32 %v1481, %v1470
    %v1483 = vmul.f32 %v1482, %v1481
    %v1484 = vmul.f32 0.5, %v1483
    %v1485 = vsub.f32 1.5, %v1484
    %v1486 = vmul.f32 %v1481, %v1485
    %vm1487 = vweird.f32 %v1470
    %vm1488 = vweird.f32 %v1481
    %vm1489 = vmor %vm1487, %vm1488
    %v1490 = vsel %vm1489, %v1481, %v1486
    %v1491 = vmul.f32 %v1457, %v1480
    %v1492 = vmul.f32 %v1458, %v1490
    %v1493 = vmul.f32 %v1491, %v1109
    %v1494 = vmul.f32 %v1492, %v1109
    %v1495 = vadd.f32 %v1493, %v1114
    %v1496 = vadd.f32 %v1494, %v1114
    %s1497 = scalar_lea.vmem %s16, 16
    %1498 = vst.msk [vmem:[%s1497] sm:$0xff] %vm488, %v1495
    %1499 = vst.msk [vmem:[%s1497 + $0x8] sm:$0x3] %vm1059, %v1496
    %v1500 = vmul.f32 %v1495, %v707
    %v1501 = vmul.f32 %v1496, %v708
    %v1502 = vsel %vm488, %v1500, 0.0
    %1503 = vadd.xlane.f32.xlu0 %v1502
    %v1504 = vpop.xlane.xlu0 %1503
    %v1505 = vsel %vm1059, %v1501, 0.0
    %1506 = vadd.xlane.f32.xlu0 %v1505
    %v1507 = vpop.xlane.xlu0 %1506
    %v1508 = vadd.f32 %v1504, %v713
    %v1509 = vadd.f32 %v1507, %v714
    %1511 = vset.pattern.permute.xlu0 0
    %1512 = vperm.xlu0 %1511, %v1508
    %v1513 = vpop.permute.xlu0 %1512
    %1516 = vset.pattern.permute.xlu0 0
    %1517 = vperm.xlu0 %1516, %v1509
    %v1518 = vpop.permute.xlu0 %1517
    %v1520 = vmul.f32 %v1513, %v724
    %v1521 = vmul.f32 %v1518, %v725
    %v1522 = vsel %vm1142, %v1520, 0.0
    %v1523 = vsel %vm1144, %v1521, 0.0
    %v1524 = vadd.f32 %v1522, %v1523
    %v1525 = vrot.slane %v1524, 4
    %v1526 = vadd.f32 %v1524, %v1525
    %v1527 = vrot.slane %v1526, 2
    %v1528 = vadd.f32 %v1526, %v1527
    %v1529 = vrot.slane %v1528, 1
    %v1530 = vadd.f32 %v1528, %v1529
    %s1531 = scalar_lea.vmem [#allocation2], 1
    %1532 = vst.msk [vmem:[%s1531] sm:$0x1] %vm1153, %v1530
    // Predicated region
    $region62: #{vitnet_forward.1} parent=1 // pred_check
      _
    $region63: #{vitnet_forward.1} parent=1 // pred_check_branch
      %1534 = sbr.rel (0) target = $region65
    $region64: #{vitnet_forward.1} parent=1 // pred_region
      %1536 = vsyncadd [#allocation3], 0
      %s1537 = sshll.u32 [#allocation2], 4
      %s1538 = int_to_ptr.vmem [resolvable:$true] %s1537
      %s1539 = sshll.u32 %s15, 4
      %s1540 = int_to_ptr.hbm [resolvable:$true] %s1539
      %1545 = dma.vmem_to_hbm [thread:$0]  %s1538, 32, %s1540, [#allocation3], 16, 16, 1
    $region65: #{vitnet_forward.1} parent=1 // pred_fallthru
      _
    // Predicated region
    $region66: #{vitnet_forward.1} parent=1 // pred_check
      _
    $region67: #{vitnet_forward.1} parent=1 // pred_check_branch
      %1547 = sbr.rel (0) target = $region69
    $region68: #{vitnet_forward.1} parent=1 // pred_region
      _
    $region69: #{vitnet_forward.1} parent=1 // pred_fallthru
      _
    // Predicated region
    $region70: #{vitnet_forward.1} parent=1 // pred_check
      _
    $region71: #{vitnet_forward.1} parent=1 // pred_check_branch
      %1549 = sbr.rel (0) target = $region73
    $region72: #{vitnet_forward.1} parent=1 // pred_region
      %1551 = dma.done [#allocation3], 32
    $region73: #{vitnet_forward.1} parent=1 // pred_fallthru
      _
    // Predicated region
    $region74: #{vitnet_forward.1} parent=1 // pred_check
      _
    $region75: #{vitnet_forward.1} parent=1 // pred_check_branch
      %1553 = sbr.rel (0) target = $region77
    $region76: #{vitnet_forward.1} parent=1 // pred_region
      _
    $region77: #{vitnet_forward.1} parent=1 // pred_fallthru
      _
    %1554 = vsyncpa [#allocation3], 1

</llo_original>
